<compile_context>
chip_gen: v7x
topology: tpu7x:2x2x1
jax: 0.10.0
libtpu: 0.0.40
codegen_flags: <defaults>
</compile_context>

<pallas_src>
import functools

import jax
import jax.numpy as jnp
import numpy as np
from jax import lax
from jax.experimental import pallas as pl
from jax.experimental.pallas import tpu as pltpu

HIDDEN = 32   # lstm_hidden_size in LSTMestimatorModule2
OUT = 4       # final MLP2 out_size


def _lstm_estimator_kernel(x_ref,       # (T*Bp, Din)  time-major, flattened inputs (B padded to 8)
                           w1a_ref,     # (Din, 32)    MLP1 layer-1 weight (pre-transposed)
                           b1a_ref,     # (1, 32)
                           w1b_ref,     # (32, H)      MLP1 layer-2 weight
                           b1b_ref,     # (1, H)
                           wih_ref,     # (H, 4H)      LSTM weight_ih.T, gate order [i,f,o,g]
                           whh_ref,     # (H, 4H)      LSTM weight_hh.T, gate order [i,f,o,g]
                           bg_ref,      # (1, 4H)      LSTM bias_ih + bias_hh, gate order [i,f,o,g]
                           w2a_ref,     # (H, 32)      MLP2 layer-1 weight
                           b2a_ref,     # (1, 32)
                           w2b_ref,     # (32, OUT)    MLP2 layer-2 weight
                           b2b_ref,     # (1, OUT)
                           h0_ref,      # (Bp, H)      initial hidden state (rows >= B are zero)
                           c0_ref,      # (Bp, H)      initial cell state
                           est_ref,     # (T*Bp, OUT)  output estimates (time-major flat)
                           h_out_ref,   # (Bp, H)      final hidden state
                           c_out_ref,   # (Bp, H)      final cell state
                           *, seq_len, batch):
    H = HIDDEN
    G = 4 * H

    # ------------- Pre-loop: all non-recurrent work, batched over T*Bp -------------
    x = x_ref[...]                                                   # (T*Bp, Din)
    y1 = jnp.tanh(jnp.dot(x, w1a_ref[...],
                          preferred_element_type=jnp.float32) + b1a_ref[...])
    y = jnp.tanh(jnp.dot(y1, w1b_ref[...],
                         preferred_element_type=jnp.float32) + b1b_ref[...])   # (T*Bp, H)

    # Input->gate contribution for every timestep, bias folded in.
    gx = jnp.dot(y, wih_ref[...],
                 preferred_element_type=jnp.float32) + bg_ref[...]             # (T*Bp, 4H)

    whh = whh_ref[...]                                               # hoisted weight read
    h = h0_ref[...]
    c = c0_ref[...]

    # Hoisted per-lane scale: 0.5 on the sigmoid lanes (i,f,o), 1.0 on the tanh lanes (g),
    # so one full-vreg tanh per step yields every gate nonlinearity
    # (sigmoid(x) = 0.5*tanh(0.5*x) + 0.5, exact identity).
    lane = lax.broadcasted_iota(jnp.int32, (1, G), 1)
    gate_scale = jnp.where(lane < 3 * H, 0.5, 1.0).astype(jnp.float32)

    # ------------- Recurrence: fully unrolled, only h @ W_hh on the serial chain ----
    hs = []
    for t in range(seq_len):
        gates = gx[t * batch:(t + 1) * batch, :] + jnp.dot(
            h, whh, preferred_element_type=jnp.float32)              # (Bp, 4H), aligned rows
        tg = jnp.tanh(gates * gate_scale)                            # one EUP launch / step
        sg = 0.5 * tg + 0.5                                          # VPU, full vreg
        i_g = sg[:, 0 * H:1 * H]
        f_g = sg[:, 1 * H:2 * H]
        o_g = sg[:, 2 * H:3 * H]
        g_g = tg[:, 3 * H:4 * H]
        c = f_g * c + i_g * g_g
        h = o_g * jnp.tanh(c)
        hs.append(h)                                                 # register-resident

    h_out_ref[...] = h
    c_out_ref[...] = c

    # ------------- Post-loop: MLP2 on (f + y) as one bulk projection + one store ----
    f_all = jnp.concatenate(hs, axis=0)                              # (T*Bp, H), off chain
    z = jnp.tanh(jnp.dot(f_all + y, w2a_ref[...],
                         preferred_element_type=jnp.float32) + b2a_ref[...])   # (T*Bp, 32)
    est_ref[...] = jnp.dot(z, w2b_ref[...],
                           preferred_element_type=jnp.float32) + b2b_ref[...]  # (T*Bp, OUT)


def lstm_estimator_forward(inputs, state, params):
    """inputs: (B, T, Din) f32, state: (h, c) each (B, H).

    Returns (estimates (B, T, 4), (h (B, H), c (B, H))) -- same semantics as
    LSTMestimatorModule2.forward in the PyTorch spec.
    """
    B, T, Din = inputs.shape
    h0, c0 = state
    (w1a, b1a, w1b, b1b, wih, whh, bg, w2a, b2a, w2b, b2b) = params
    H = HIDDEN

    # Pad batch to a full sublane group so every per-step slice/store in the kernel is
    # sublane-aligned.  Padded rows are zero and stripped on output.
    B_pad = ((B + 7) // 8) * 8
    pad = B_pad - B
    if pad:
        inputs_p = jnp.pad(inputs, ((0, pad), (0, 0), (0, 0)))
        h0_p = jnp.pad(h0, ((0, pad), (0, 0)))
        c0_p = jnp.pad(c0, ((0, pad), (0, 0)))
    else:
        inputs_p, h0_p, c0_p = inputs, h0, c0

    # Host-side layout prep: time-major + flattened rows (row index = t*B_pad + b).
    x_tm = jnp.transpose(inputs_p, (1, 0, 2)).reshape(T * B_pad, Din)

    # Reorder LSTM gate columns from PyTorch [i,f,g,o] to [i,f,o,g] so the kernel gets all
    # sigmoid gates in one contiguous 3H lane block (single full-vreg nonlinearity per step).
    def permute_gates(w):
        return jnp.concatenate([w[..., 0:H], w[..., H:2 * H],
                                w[..., 3 * H:4 * H], w[..., 2 * H:3 * H]], axis=-1)

    wih_p, whh_p, bg_p = permute_gates(wih), permute_gates(whh), permute_gates(bg)

    vmem = pl.BlockSpec(memory_space=pltpu.MemorySpace.VMEM)
    kernel = functools.partial(_lstm_estimator_kernel, seq_len=T, batch=B_pad)

    est_flat, h_out, c_out = pl.pallas_call(
        kernel,
        out_shape=(
            jax.ShapeDtypeStruct((T * B_pad, OUT), jnp.float32),
            jax.ShapeDtypeStruct((B_pad, HIDDEN), jnp.float32),
            jax.ShapeDtypeStruct((B_pad, HIDDEN), jnp.float32),
        ),
        in_specs=[vmem] * 14,
        out_specs=(vmem, vmem, vmem),
    )(x_tm, w1a, b1a, w1b, b1b, wih_p, whh_p, bg_p, w2a, b2a, w2b, b2b, h0_p, c0_p)

    estimates = jnp.transpose(est_flat.reshape(T, B_pad, OUT), (1, 0, 2))[:B]  # (B, T, 4)
    return estimates, (h_out[:B], c_out[:B])


def init_params(key, input_size):
    """Synthetic params matching the PyTorch parameter shapes (weights pre-transposed).

    Weights: xavier_normal (MLPs) / uniform(+-1/sqrt(H)) (LSTM), as in the module.
    MLP biases get small nonzero values purely so the test exercises the bias-add paths
    (PyTorch SlimFC default bias init is zero).  LSTM gate order here is PyTorch's [i,f,g,o];
    the kernel wrapper permutes it internally.
    """
    ks = jax.random.split(key, 12)
    H = HIDDEN

    def xavier_normal(k, fan_in, fan_out):
        std = np.sqrt(2.0 / (fan_in + fan_out))
        return (std * jax.random.normal(k, (fan_in, fan_out))).astype(jnp.float32)

    def small_bias(k, n):
        return (0.1 * jax.random.normal(k, (1, n))).astype(jnp.float32)

    # MLP1: Linear(input_size -> 32) tanh, Linear(32 -> H) tanh
    w1a = xavier_normal(ks[0], input_size, 32)
    b1a = small_bias(ks[1], 32)
    w1b = xavier_normal(ks[2], 32, H)
    b1b = small_bias(ks[3], H)

    # LSTM(H -> H), PyTorch default uniform(-1/sqrt(H), 1/sqrt(H)); gate order i,f,g,o.
    bound = 1.0 / np.sqrt(H)
    wih = jax.random.uniform(ks[4], (H, 4 * H), jnp.float32, -bound, bound)
    whh = jax.random.uniform(ks[5], (H, 4 * H), jnp.float32, -bound, bound)
    b_ih = jax.random.uniform(ks[6], (4 * H,), jnp.float32, -bound, bound)
    b_hh = jax.random.uniform(ks[7], (4 * H,), jnp.float32, -bound, bound)
    bg = (b_ih + b_hh).reshape(1, 4 * H)

    # MLP2: Linear(H -> 32) tanh, Linear(32 -> 4) linear
    w2a = xavier_normal(ks[8], H, 32)
    b2a = small_bias(ks[9], 32)
    w2b = xavier_normal(ks[10], 32, OUT)
    b2b = small_bias(ks[11], OUT)

    return (w1a, b1a, w1b, b1b, wih, whh, bg, w2a, b2a, w2b, b2b)


def _reference_forward(inputs, state, params):
    """Pure-JAX reference reproducing LSTMestimatorModule2.forward, for validation."""
    (w1a, b1a, w1b, b1b, wih, whh, bg, w2a, b2a, w2b, b2b) = params
    h, c = state
    H = HIDDEN

    y = jnp.tanh(jnp.tanh(inputs @ w1a + b1a) @ w1b + b1b)       # (B, T, H)

    def cell(carry, yt):
        h, c = carry
        gates = yt @ wih + h @ whh + bg                          # PyTorch gate order i,f,g,o
        i_g = jax.nn.sigmoid(gates[:, 0 * H:1 * H])
        f_g = jax.nn.sigmoid(gates[:, 1 * H:2 * H])
        g_g = jnp.tanh(gates[:, 2 * H:3 * H])
        o_g = jax.nn.sigmoid(gates[:, 3 * H:4 * H])
        c_new = f_g * c + i_g * g_g
        h_new = o_g * jnp.tanh(c_new)
        return (h_new, c_new), h_new

    (h_f, c_f), f_seq = lax.scan(cell, (h, c), jnp.transpose(y, (1, 0, 2)))
    f = jnp.transpose(f_seq, (1, 0, 2))                          # (B, T, H)
    est = jnp.tanh((f + y) @ w2a + b2a) @ w2b + b2b              # (B, T, 4)
    return est, (h_f, c_f)


if __name__ == "__main__":
    B, T = 2, 8
    INPUT_SIZE = 2 * 15 + 4   # = 34, as constructed in LSTMestimator

    key = jax.random.PRNGKey(0)
    k_in, k_h, k_c, k_p = jax.random.split(key, 4)

    inputs = jax.random.normal(k_in, (B, T, INPUT_SIZE), jnp.float32)
    h0 = jax.random.normal(k_h, (B, HIDDEN), jnp.float32)
    c0 = jax.random.normal(k_c, (B, HIDDEN), jnp.float32)
    params = init_params(k_p, INPUT_SIZE)

    fwd = jax.jit(lstm_estimator_forward)
    est, (h_out, c_out) = fwd(inputs, (h0, c0), params)
    jax.block_until_ready((est, h_out, c_out))

    # Validate against the pure-JAX reference of the PyTorch forward.
    est_ref, (h_ref, c_ref) = _reference_forward(inputs, (h0, c0), params)
    np.testing.assert_allclose(np.asarray(est), np.asarray(est_ref), rtol=1e-5, atol=1e-5)
    np.testing.assert_allclose(np.asarray(h_out), np.asarray(h_ref), rtol=1e-5, atol=1e-5)
    np.testing.assert_allclose(np.asarray(c_out), np.asarray(c_ref), rtol=1e-5, atol=1e-5)

    print("KERNEL_OK")
</pallas_src>

<mosaic_0001>
module attributes {stable_mosaic.version = 11 : i64} {
  func.func @_lstm_estimator_kernel(%arg0: memref<64x34xf32, #tpu.memory_space<vmem>>, %arg1: memref<34x32xf32, #tpu.memory_space<vmem>>, %arg2: memref<1x32xf32, #tpu.memory_space<vmem>>, %arg3: memref<32x32xf32, #tpu.memory_space<vmem>>, %arg4: memref<1x32xf32, #tpu.memory_space<vmem>>, %arg5: memref<32x128xf32, #tpu.memory_space<vmem>>, %arg6: memref<32x128xf32, #tpu.memory_space<vmem>>, %arg7: memref<1x128xf32, #tpu.memory_space<vmem>>, %arg8: memref<32x32xf32, #tpu.memory_space<vmem>>, %arg9: memref<1x32xf32, #tpu.memory_space<vmem>>, %arg10: memref<32x4xf32, #tpu.memory_space<vmem>>, %arg11: memref<1x4xf32, #tpu.memory_space<vmem>>, %arg12: memref<8x32xf32, #tpu.memory_space<vmem>>, %arg13: memref<8x32xf32, #tpu.memory_space<vmem>>, %arg14: memref<64x4xf32, #tpu.memory_space<vmem>>, %arg15: memref<8x32xf32, #tpu.memory_space<vmem>>, %arg16: memref<8x32xf32, #tpu.memory_space<vmem>>) attributes {dimension_semantics = [], scalar_prefetch = 0 : i64, scratch_operands = 0 : i64, tpu.core_type = #tpu.core_type<tc>} {
    %c0 = arith.constant 0 : index
    %c0_0 = arith.constant 0 : index
    %0 = vector.load %arg0[%c0, %c0_0] : memref<64x34xf32, #tpu.memory_space<vmem>>, vector<64x34xf32>
    %c0_1 = arith.constant 0 : index
    %c0_2 = arith.constant 0 : index
    %1 = vector.load %arg1[%c0_1, %c0_2] : memref<34x32xf32, #tpu.memory_space<vmem>>, vector<34x32xf32>
    %cst = arith.constant dense<0.000000e+00> : vector<64x32xf32>
    %2 = tpu.matmul %0, %1, %cst {dimension_numbers = #tpu.dot_dimension_numbers<[1], [0], [0], [1], [0, 0, 1, 1], [], []>} : vector<64x34xf32>, vector<34x32xf32>, vector<64x32xf32> -> vector<64x32xf32>
    %c0_3 = arith.constant 0 : index
    %c0_4 = arith.constant 0 : index
    %3 = vector.load %arg2[%c0_3, %c0_4] : memref<1x32xf32, #tpu.memory_space<vmem>>, vector<1x32xf32>
    %4 = vector.broadcast %3 : vector<1x32xf32> to vector<64x32xf32>
    %5 = arith.addf %2, %4 : vector<64x32xf32>
    %6 = math.tanh %5 : vector<64x32xf32>
    %c0_5 = arith.constant 0 : index
    %c0_6 = arith.constant 0 : index
    %7 = vector.load %arg3[%c0_5, %c0_6] : memref<32x32xf32, #tpu.memory_space<vmem>>, vector<32x32xf32>
    %cst_7 = arith.constant dense<0.000000e+00> : vector<64x32xf32>
    %8 = tpu.matmul %6, %7, %cst_7 {dimension_numbers = #tpu.dot_dimension_numbers<[1], [0], [0], [1], [0, 0, 1, 1], [], []>} : vector<64x32xf32>, vector<32x32xf32>, vector<64x32xf32> -> vector<64x32xf32>
    %c0_8 = arith.constant 0 : index
    %c0_9 = arith.constant 0 : index
    %9 = vector.load %arg4[%c0_8, %c0_9] : memref<1x32xf32, #tpu.memory_space<vmem>>, vector<1x32xf32>
    %10 = vector.broadcast %9 : vector<1x32xf32> to vector<64x32xf32>
    %11 = arith.addf %8, %10 : vector<64x32xf32>
    %12 = math.tanh %11 : vector<64x32xf32>
    %c0_10 = arith.constant 0 : index
    %c0_11 = arith.constant 0 : index
    %13 = vector.load %arg5[%c0_10, %c0_11] : memref<32x128xf32, #tpu.memory_space<vmem>>, vector<32x128xf32>
    %cst_12 = arith.constant dense<0.000000e+00> : vector<64x128xf32>
    %14 = tpu.matmul %12, %13, %cst_12 {dimension_numbers = #tpu.dot_dimension_numbers<[1], [0], [0], [1], [0, 0, 1, 1], [], []>} : vector<64x32xf32>, vector<32x128xf32>, vector<64x128xf32> -> vector<64x128xf32>
    %c0_13 = arith.constant 0 : index
    %c0_14 = arith.constant 0 : index
    %15 = vector.load %arg7[%c0_13, %c0_14] : memref<1x128xf32, #tpu.memory_space<vmem>>, vector<1x128xf32>
    %16 = vector.broadcast %15 : vector<1x128xf32> to vector<64x128xf32>
    %17 = arith.addf %14, %16 : vector<64x128xf32>
    %c0_15 = arith.constant 0 : index
    %c0_16 = arith.constant 0 : index
    %18 = vector.load %arg6[%c0_15, %c0_16] : memref<32x128xf32, #tpu.memory_space<vmem>>, vector<32x128xf32>
    %c0_17 = arith.constant 0 : index
    %c0_18 = arith.constant 0 : index
    %19 = vector.load %arg12[%c0_17, %c0_18] : memref<8x32xf32, #tpu.memory_space<vmem>>, vector<8x32xf32>
    %c0_19 = arith.constant 0 : index
    %c0_20 = arith.constant 0 : index
    %20 = vector.load %arg13[%c0_19, %c0_20] : memref<8x32xf32, #tpu.memory_space<vmem>>, vector<8x32xf32>
    %21 = tpu.iota {dimensions = array<i32: 1>} : vector<1x128xi32>
    %c96_i32 = arith.constant 96 : i32
    %22 = vector.broadcast %c96_i32 : i32 to vector<1x128xi32>
    %23 = arith.cmpi slt, %21, %22 : vector<1x128xi32>
    %cst_21 = arith.constant 5.000000e-01 : f32
    %cst_22 = arith.constant 1.000000e+00 : f32
    %24 = vector.broadcast %cst_21 : f32 to vector<1x128xf32>
    %25 = vector.broadcast %cst_22 : f32 to vector<1x128xf32>
    %26 = arith.select %23, %24, %25 : vector<1x128xi1>, vector<1x128xf32>
    %27 = vector.extract_strided_slice %17 {offsets = [0, 0], sizes = [8, 128], strides = [1, 1]} : vector<64x128xf32> to vector<8x128xf32>
    %cst_23 = arith.constant dense<0.000000e+00> : vector<8x128xf32>
    %28 = tpu.matmul %19, %18, %cst_23 {dimension_numbers = #tpu.dot_dimension_numbers<[1], [0], [0], [1], [0, 0, 1, 1], [], []>} : vector<8x32xf32>, vector<32x128xf32>, vector<8x128xf32> -> vector<8x128xf32>
    %29 = arith.addf %27, %28 : vector<8x128xf32>
    %30 = vector.broadcast %26 : vector<1x128xf32> to vector<8x128xf32>
    %31 = arith.mulf %29, %30 : vector<8x128xf32>
    %32 = math.tanh %31 : vector<8x128xf32>
    %cst_24 = arith.constant 5.000000e-01 : f32
    %33 = vector.broadcast %cst_24 : f32 to vector<8x128xf32>
    %34 = arith.mulf %33, %32 : vector<8x128xf32>
    %cst_25 = arith.constant 5.000000e-01 : f32
    %35 = vector.broadcast %cst_25 : f32 to vector<8x128xf32>
    %36 = arith.addf %34, %35 : vector<8x128xf32>
    %37 = vector.extract_strided_slice %36 {offsets = [0, 0], sizes = [8, 32], strides = [1, 1]} : vector<8x128xf32> to vector<8x32xf32>
    %38 = vector.extract_strided_slice %36 {offsets = [0, 32], sizes = [8, 32], strides = [1, 1]} : vector<8x128xf32> to vector<8x32xf32>
    %39 = vector.extract_strided_slice %36 {offsets = [0, 64], sizes = [8, 32], strides = [1, 1]} : vector<8x128xf32> to vector<8x32xf32>
    %40 = vector.extract_strided_slice %32 {offsets = [0, 96], sizes = [8, 32], strides = [1, 1]} : vector<8x128xf32> to vector<8x32xf32>
    %41 = arith.mulf %38, %20 : vector<8x32xf32>
    %42 = arith.mulf %37, %40 : vector<8x32xf32>
    %43 = arith.addf %41, %42 : vector<8x32xf32>
    %44 = math.tanh %43 : vector<8x32xf32>
    %45 = arith.mulf %39, %44 : vector<8x32xf32>
    %46 = vector.extract_strided_slice %17 {offsets = [8, 0], sizes = [8, 128], strides = [1, 1]} : vector<64x128xf32> to vector<8x128xf32>
    %cst_26 = arith.constant dense<0.000000e+00> : vector<8x128xf32>
    %47 = tpu.matmul %45, %18, %cst_26 {dimension_numbers = #tpu.dot_dimension_numbers<[1], [0], [0], [1], [0, 0, 1, 1], [], []>} : vector<8x32xf32>, vector<32x128xf32>, vector<8x128xf32> -> vector<8x128xf32>
    %48 = arith.addf %46, %47 : vector<8x128xf32>
    %49 = vector.broadcast %26 : vector<1x128xf32> to vector<8x128xf32>
    %50 = arith.mulf %48, %49 : vector<8x128xf32>
    %51 = math.tanh %50 : vector<8x128xf32>
    %cst_27 = arith.constant 5.000000e-01 : f32
    %52 = vector.broadcast %cst_27 : f32 to vector<8x128xf32>
    %53 = arith.mulf %52, %51 : vector<8x128xf32>
    %cst_28 = arith.constant 5.000000e-01 : f32
    %54 = vector.broadcast %cst_28 : f32 to vector<8x128xf32>
    %55 = arith.addf %53, %54 : vector<8x128xf32>
    %56 = vector.extract_strided_slice %55 {offsets = [0, 0], sizes = [8, 32], strides = [1, 1]} : vector<8x128xf32> to vector<8x32xf32>
    %57 = vector.extract_strided_slice %55 {offsets = [0, 32], sizes = [8, 32], strides = [1, 1]} : vector<8x128xf32> to vector<8x32xf32>
    %58 = vector.extract_strided_slice %55 {offsets = [0, 64], sizes = [8, 32], strides = [1, 1]} : vector<8x128xf32> to vector<8x32xf32>
    %59 = vector.extract_strided_slice %51 {offsets = [0, 96], sizes = [8, 32], strides = [1, 1]} : vector<8x128xf32> to vector<8x32xf32>
    %60 = arith.mulf %57, %43 : vector<8x32xf32>
    %61 = arith.mulf %56, %59 : vector<8x32xf32>
    %62 = arith.addf %60, %61 : vector<8x32xf32>
    %63 = math.tanh %62 : vector<8x32xf32>
    %64 = arith.mulf %58, %63 : vector<8x32xf32>
    %65 = vector.extract_strided_slice %17 {offsets = [16, 0], sizes = [8, 128], strides = [1, 1]} : vector<64x128xf32> to vector<8x128xf32>
    %cst_29 = arith.constant dense<0.000000e+00> : vector<8x128xf32>
    %66 = tpu.matmul %64, %18, %cst_29 {dimension_numbers = #tpu.dot_dimension_numbers<[1], [0], [0], [1], [0, 0, 1, 1], [], []>} : vector<8x32xf32>, vector<32x128xf32>, vector<8x128xf32> -> vector<8x128xf32>
    %67 = arith.addf %65, %66 : vector<8x128xf32>
    %68 = vector.broadcast %26 : vector<1x128xf32> to vector<8x128xf32>
    %69 = arith.mulf %67, %68 : vector<8x128xf32>
    %70 = math.tanh %69 : vector<8x128xf32>
    %cst_30 = arith.constant 5.000000e-01 : f32
    %71 = vector.broadcast %cst_30 : f32 to vector<8x128xf32>
    %72 = arith.mulf %71, %70 : vector<8x128xf32>
    %cst_31 = arith.constant 5.000000e-01 : f32
    %73 = vector.broadcast %cst_31 : f32 to vector<8x128xf32>
    %74 = arith.addf %72, %73 : vector<8x128xf32>
    %75 = vector.extract_strided_slice %74 {offsets = [0, 0], sizes = [8, 32], strides = [1, 1]} : vector<8x128xf32> to vector<8x32xf32>
    %76 = vector.extract_strided_slice %74 {offsets = [0, 32], sizes = [8, 32], strides = [1, 1]} : vector<8x128xf32> to vector<8x32xf32>
    %77 = vector.extract_strided_slice %74 {offsets = [0, 64], sizes = [8, 32], strides = [1, 1]} : vector<8x128xf32> to vector<8x32xf32>
    %78 = vector.extract_strided_slice %70 {offsets = [0, 96], sizes = [8, 32], strides = [1, 1]} : vector<8x128xf32> to vector<8x32xf32>
    %79 = arith.mulf %76, %62 : vector<8x32xf32>
    %80 = arith.mulf %75, %78 : vector<8x32xf32>
    %81 = arith.addf %79, %80 : vector<8x32xf32>
    %82 = math.tanh %81 : vector<8x32xf32>
    %83 = arith.mulf %77, %82 : vector<8x32xf32>
    %84 = vector.extract_strided_slice %17 {offsets = [24, 0], sizes = [8, 128], strides = [1, 1]} : vector<64x128xf32> to vector<8x128xf32>
    %cst_32 = arith.constant dense<0.000000e+00> : vector<8x128xf32>
    %85 = tpu.matmul %83, %18, %cst_32 {dimension_numbers = #tpu.dot_dimension_numbers<[1], [0], [0], [1], [0, 0, 1, 1], [], []>} : vector<8x32xf32>, vector<32x128xf32>, vector<8x128xf32> -> vector<8x128xf32>
    %86 = arith.addf %84, %85 : vector<8x128xf32>
    %87 = vector.broadcast %26 : vector<1x128xf32> to vector<8x128xf32>
    %88 = arith.mulf %86, %87 : vector<8x128xf32>
    %89 = math.tanh %88 : vector<8x128xf32>
    %cst_33 = arith.constant 5.000000e-01 : f32
    %90 = vector.broadcast %cst_33 : f32 to vector<8x128xf32>
    %91 = arith.mulf %90, %89 : vector<8x128xf32>
    %cst_34 = arith.constant 5.000000e-01 : f32
    %92 = vector.broadcast %cst_34 : f32 to vector<8x128xf32>
    %93 = arith.addf %91, %92 : vector<8x128xf32>
    %94 = vector.extract_strided_slice %93 {offsets = [0, 0], sizes = [8, 32], strides = [1, 1]} : vector<8x128xf32> to vector<8x32xf32>
    %95 = vector.extract_strided_slice %93 {offsets = [0, 32], sizes = [8, 32], strides = [1, 1]} : vector<8x128xf32> to vector<8x32xf32>
    %96 = vector.extract_strided_slice %93 {offsets = [0, 64], sizes = [8, 32], strides = [1, 1]} : vector<8x128xf32> to vector<8x32xf32>
    %97 = vector.extract_strided_slice %89 {offsets = [0, 96], sizes = [8, 32], strides = [1, 1]} : vector<8x128xf32> to vector<8x32xf32>
    %98 = arith.mulf %95, %81 : vector<8x32xf32>
    %99 = arith.mulf %94, %97 : vector<8x32xf32>
    %100 = arith.addf %98, %99 : vector<8x32xf32>
    %101 = math.tanh %100 : vector<8x32xf32>
    %102 = arith.mulf %96, %101 : vector<8x32xf32>
    %103 = vector.extract_strided_slice %17 {offsets = [32, 0], sizes = [8, 128], strides = [1, 1]} : vector<64x128xf32> to vector<8x128xf32>
    %cst_35 = arith.constant dense<0.000000e+00> : vector<8x128xf32>
    %104 = tpu.matmul %102, %18, %cst_35 {dimension_numbers = #tpu.dot_dimension_numbers<[1], [0], [0], [1], [0, 0, 1, 1], [], []>} : vector<8x32xf32>, vector<32x128xf32>, vector<8x128xf32> -> vector<8x128xf32>
    %105 = arith.addf %103, %104 : vector<8x128xf32>
    %106 = vector.broadcast %26 : vector<1x128xf32> to vector<8x128xf32>
    %107 = arith.mulf %105, %106 : vector<8x128xf32>
    %108 = math.tanh %107 : vector<8x128xf32>
    %cst_36 = arith.constant 5.000000e-01 : f32
    %109 = vector.broadcast %cst_36 : f32 to vector<8x128xf32>
    %110 = arith.mulf %109, %108 : vector<8x128xf32>
    %cst_37 = arith.constant 5.000000e-01 : f32
    %111 = vector.broadcast %cst_37 : f32 to vector<8x128xf32>
    %112 = arith.addf %110, %111 : vector<8x128xf32>
    %113 = vector.extract_strided_slice %112 {offsets = [0, 0], sizes = [8, 32], strides = [1, 1]} : vector<8x128xf32> to vector<8x32xf32>
    %114 = vector.extract_strided_slice %112 {offsets = [0, 32], sizes = [8, 32], strides = [1, 1]} : vector<8x128xf32> to vector<8x32xf32>
    %115 = vector.extract_strided_slice %112 {offsets = [0, 64], sizes = [8, 32], strides = [1, 1]} : vector<8x128xf32> to vector<8x32xf32>
    %116 = vector.extract_strided_slice %108 {offsets = [0, 96], sizes = [8, 32], strides = [1, 1]} : vector<8x128xf32> to vector<8x32xf32>
    %117 = arith.mulf %114, %100 : vector<8x32xf32>
    %118 = arith.mulf %113, %116 : vector<8x32xf32>
    %119 = arith.addf %117, %118 : vector<8x32xf32>
    %120 = math.tanh %119 : vector<8x32xf32>
    %121 = arith.mulf %115, %120 : vector<8x32xf32>
    %122 = vector.extract_strided_slice %17 {offsets = [40, 0], sizes = [8, 128], strides = [1, 1]} : vector<64x128xf32> to vector<8x128xf32>
    %cst_38 = arith.constant dense<0.000000e+00> : vector<8x128xf32>
    %123 = tpu.matmul %121, %18, %cst_38 {dimension_numbers = #tpu.dot_dimension_numbers<[1], [0], [0], [1], [0, 0, 1, 1], [], []>} : vector<8x32xf32>, vector<32x128xf32>, vector<8x128xf32> -> vector<8x128xf32>
    %124 = arith.addf %122, %123 : vector<8x128xf32>
    %125 = vector.broadcast %26 : vector<1x128xf32> to vector<8x128xf32>
    %126 = arith.mulf %124, %125 : vector<8x128xf32>
    %127 = math.tanh %126 : vector<8x128xf32>
    %cst_39 = arith.constant 5.000000e-01 : f32
    %128 = vector.broadcast %cst_39 : f32 to vector<8x128xf32>
    %129 = arith.mulf %128, %127 : vector<8x128xf32>
    %cst_40 = arith.constant 5.000000e-01 : f32
    %130 = vector.broadcast %cst_40 : f32 to vector<8x128xf32>
    %131 = arith.addf %129, %130 : vector<8x128xf32>
    %132 = vector.extract_strided_slice %131 {offsets = [0, 0], sizes = [8, 32], strides = [1, 1]} : vector<8x128xf32> to vector<8x32xf32>
    %133 = vector.extract_strided_slice %131 {offsets = [0, 32], sizes = [8, 32], strides = [1, 1]} : vector<8x128xf32> to vector<8x32xf32>
    %134 = vector.extract_strided_slice %131 {offsets = [0, 64], sizes = [8, 32], strides = [1, 1]} : vector<8x128xf32> to vector<8x32xf32>
    %135 = vector.extract_strided_slice %127 {offsets = [0, 96], sizes = [8, 32], strides = [1, 1]} : vector<8x128xf32> to vector<8x32xf32>
    %136 = arith.mulf %133, %119 : vector<8x32xf32>
    %137 = arith.mulf %132, %135 : vector<8x32xf32>
    %138 = arith.addf %136, %137 : vector<8x32xf32>
    %139 = math.tanh %138 : vector<8x32xf32>
    %140 = arith.mulf %134, %139 : vector<8x32xf32>
    %141 = vector.extract_strided_slice %17 {offsets = [48, 0], sizes = [8, 128], strides = [1, 1]} : vector<64x128xf32> to vector<8x128xf32>
    %cst_41 = arith.constant dense<0.000000e+00> : vector<8x128xf32>
    %142 = tpu.matmul %140, %18, %cst_41 {dimension_numbers = #tpu.dot_dimension_numbers<[1], [0], [0], [1], [0, 0, 1, 1], [], []>} : vector<8x32xf32>, vector<32x128xf32>, vector<8x128xf32> -> vector<8x128xf32>
    %143 = arith.addf %141, %142 : vector<8x128xf32>
    %144 = vector.broadcast %26 : vector<1x128xf32> to vector<8x128xf32>
    %145 = arith.mulf %143, %144 : vector<8x128xf32>
    %146 = math.tanh %145 : vector<8x128xf32>
    %cst_42 = arith.constant 5.000000e-01 : f32
    %147 = vector.broadcast %cst_42 : f32 to vector<8x128xf32>
    %148 = arith.mulf %147, %146 : vector<8x128xf32>
    %cst_43 = arith.constant 5.000000e-01 : f32
    %149 = vector.broadcast %cst_43 : f32 to vector<8x128xf32>
    %150 = arith.addf %148, %149 : vector<8x128xf32>
    %151 = vector.extract_strided_slice %150 {offsets = [0, 0], sizes = [8, 32], strides = [1, 1]} : vector<8x128xf32> to vector<8x32xf32>
    %152 = vector.extract_strided_slice %150 {offsets = [0, 32], sizes = [8, 32], strides = [1, 1]} : vector<8x128xf32> to vector<8x32xf32>
    %153 = vector.extract_strided_slice %150 {offsets = [0, 64], sizes = [8, 32], strides = [1, 1]} : vector<8x128xf32> to vector<8x32xf32>
    %154 = vector.extract_strided_slice %146 {offsets = [0, 96], sizes = [8, 32], strides = [1, 1]} : vector<8x128xf32> to vector<8x32xf32>
    %155 = arith.mulf %152, %138 : vector<8x32xf32>
    %156 = arith.mulf %151, %154 : vector<8x32xf32>
    %157 = arith.addf %155, %156 : vector<8x32xf32>
    %158 = math.tanh %157 : vector<8x32xf32>
    %159 = arith.mulf %153, %158 : vector<8x32xf32>
    %160 = vector.extract_strided_slice %17 {offsets = [56, 0], sizes = [8, 128], strides = [1, 1]} : vector<64x128xf32> to vector<8x128xf32>
    %cst_44 = arith.constant dense<0.000000e+00> : vector<8x128xf32>
    %161 = tpu.matmul %159, %18, %cst_44 {dimension_numbers = #tpu.dot_dimension_numbers<[1], [0], [0], [1], [0, 0, 1, 1], [], []>} : vector<8x32xf32>, vector<32x128xf32>, vector<8x128xf32> -> vector<8x128xf32>
    %162 = arith.addf %160, %161 : vector<8x128xf32>
    %163 = vector.broadcast %26 : vector<1x128xf32> to vector<8x128xf32>
    %164 = arith.mulf %162, %163 : vector<8x128xf32>
    %165 = math.tanh %164 : vector<8x128xf32>
    %cst_45 = arith.constant 5.000000e-01 : f32
    %166 = vector.broadcast %cst_45 : f32 to vector<8x128xf32>
    %167 = arith.mulf %166, %165 : vector<8x128xf32>
    %cst_46 = arith.constant 5.000000e-01 : f32
    %168 = vector.broadcast %cst_46 : f32 to vector<8x128xf32>
    %169 = arith.addf %167, %168 : vector<8x128xf32>
    %170 = vector.extract_strided_slice %169 {offsets = [0, 0], sizes = [8, 32], strides = [1, 1]} : vector<8x128xf32> to vector<8x32xf32>
    %171 = vector.extract_strided_slice %169 {offsets = [0, 32], sizes = [8, 32], strides = [1, 1]} : vector<8x128xf32> to vector<8x32xf32>
    %172 = vector.extract_strided_slice %169 {offsets = [0, 64], sizes = [8, 32], strides = [1, 1]} : vector<8x128xf32> to vector<8x32xf32>
    %173 = vector.extract_strided_slice %165 {offsets = [0, 96], sizes = [8, 32], strides = [1, 1]} : vector<8x128xf32> to vector<8x32xf32>
    %174 = arith.mulf %171, %157 : vector<8x32xf32>
    %175 = arith.mulf %170, %173 : vector<8x32xf32>
    %176 = arith.addf %174, %175 : vector<8x32xf32>
    %177 = math.tanh %176 : vector<8x32xf32>
    %178 = arith.mulf %172, %177 : vector<8x32xf32>
    %c0_47 = arith.constant 0 : index
    %c0_48 = arith.constant 0 : index
    %179 = vector.load %arg15[%c0_47, %c0_48] : memref<8x32xf32, #tpu.memory_space<vmem>>, vector<8x32xf32>
    tpu.vector_store %arg15[%c0_47, %c0_48], %178 {strides = array<i32>} : memref<8x32xf32, #tpu.memory_space<vmem>>, vector<8x32xf32>,
    %c0_49 = arith.constant 0 : index
    %c0_50 = arith.constant 0 : index
    %180 = vector.load %arg16[%c0_49, %c0_50] : memref<8x32xf32, #tpu.memory_space<vmem>>, vector<8x32xf32>
    tpu.vector_store %arg16[%c0_49, %c0_50], %176 {strides = array<i32>} : memref<8x32xf32, #tpu.memory_space<vmem>>, vector<8x32xf32>,
    %181 = tpu.concatenate %45, %64, %83, %102, %121, %140, %159, %178 in 0 : vector<8x32xf32>, vector<8x32xf32>, vector<8x32xf32>, vector<8x32xf32>, vector<8x32xf32>, vector<8x32xf32>, vector<8x32xf32>, vector<8x32xf32> -> vector<64x32xf32>
    %182 = arith.addf %181, %12 : vector<64x32xf32>
    %c0_51 = arith.constant 0 : index
    %c0_52 = arith.constant 0 : index
    %183 = vector.load %arg8[%c0_51, %c0_52] : memref<32x32xf32, #tpu.memory_space<vmem>>, vector<32x32xf32>
    %cst_53 = arith.constant dense<0.000000e+00> : vector<64x32xf32>
    %184 = tpu.matmul %182, %183, %cst_53 {dimension_numbers = #tpu.dot_dimension_numbers<[1], [0], [0], [1], [0, 0, 1, 1], [], []>} : vector<64x32xf32>, vector<32x32xf32>, vector<64x32xf32> -> vector<64x32xf32>
    %c0_54 = arith.constant 0 : index
    %c0_55 = arith.constant 0 : index
    %185 = vector.load %arg9[%c0_54, %c0_55] : memref<1x32xf32, #tpu.memory_space<vmem>>, vector<1x32xf32>
    %186 = vector.broadcast %185 : vector<1x32xf32> to vector<64x32xf32>
    %187 = arith.addf %184, %186 : vector<64x32xf32>
    %188 = math.tanh %187 : vector<64x32xf32>
    %c0_56 = arith.constant 0 : index
    %c0_57 = arith.constant 0 : index
    %189 = vector.load %arg10[%c0_56, %c0_57] : memref<32x4xf32, #tpu.memory_space<vmem>>, vector<32x4xf32>
    %cst_58 = arith.constant dense<0.000000e+00> : vector<64x4xf32>
    %190 = tpu.matmul %188, %189, %cst_58 {dimension_numbers = #tpu.dot_dimension_numbers<[1], [0], [0], [1], [0, 0, 1, 1], [], []>} : vector<64x32xf32>, vector<32x4xf32>, vector<64x4xf32> -> vector<64x4xf32>
    %c0_59 = arith.constant 0 : index
    %c0_60 = arith.constant 0 : index
    %191 = vector.load %arg11[%c0_59, %c0_60] : memref<1x4xf32, #tpu.memory_space<vmem>>, vector<1x4xf32>
    %192 = vector.broadcast %191 : vector<1x4xf32> to vector<64x4xf32>
    %193 = arith.addf %190, %192 : vector<64x4xf32>
    %c0_61 = arith.constant 0 : index
    %c0_62 = arith.constant 0 : index
    %194 = vector.load %arg14[%c0_61, %c0_62] : memref<64x4xf32, #tpu.memory_space<vmem>>, vector<64x4xf32>
    tpu.vector_store %arg14[%c0_61, %c0_62], %193 {strides = array<i32>} : memref<64x4xf32, #tpu.memory_space<vmem>>, vector<64x4xf32>,
    return
  }
}

</mosaic_0001>

<llo_original>
// kernel: lstm_estimator_forward.1
$region0: #{lstm_estimator_forward.1}
  #allocation0 [shape = 'u32[]', space=smem, size = 0x4, offset = 0x4, fixed_abs, tag = 'smem constant byte address 0x4 - core index']
  #allocation1 [shape = 'u32[144,128]{1,0:T(1,128)}', space=vmem, size = 0x12000, scoped, tag = 'internal scratch']
  %s0 = inlined_call_operand.vmem [shape: f32[64,34], index: 0, kind: input, shape index: {}]
  %s1 = inlined_call_operand.vmem [shape: f32[34,32], index: 1, kind: input, shape index: {}]
  %s2 = inlined_call_operand.vmem [shape: f32[1,32], index: 2, kind: input, shape index: {}]
  %s3 = inlined_call_operand.vmem [shape: f32[32,32], index: 3, kind: input, shape index: {}]
  %s4 = inlined_call_operand.vmem [shape: f32[1,32], index: 4, kind: input, shape index: {}]
  %s5 = inlined_call_operand.vmem [shape: f32[32,128], index: 5, kind: input, shape index: {}]
  %s6 = inlined_call_operand.vmem [shape: f32[32,128], index: 6, kind: input, shape index: {}]
  %s7 = inlined_call_operand.vmem [shape: f32[1,128], index: 7, kind: input, shape index: {}]
  %s8 = inlined_call_operand.vmem [shape: f32[32,32], index: 8, kind: input, shape index: {}]
  %s9 = inlined_call_operand.vmem [shape: f32[1,32], index: 9, kind: input, shape index: {}]
  %s10 = inlined_call_operand.vmem [shape: f32[32,4], index: 10, kind: input, shape index: {}]
  %s11 = inlined_call_operand.vmem [shape: f32[1,4], index: 11, kind: input, shape index: {}]
  %s12 = inlined_call_operand.vmem [shape: f32[8,32], index: 12, kind: input, shape index: {}]
  %s13 = inlined_call_operand.vmem [shape: f32[8,32], index: 13, kind: input, shape index: {}]
  %s14 = inlined_call_operand.vmem [shape: f32[64,4], index: 14, kind: output, shape index: {0}]
  %s15 = inlined_call_operand.vmem [shape: f32[8,32], index: 15, kind: output, shape index: {1}]
  %s16 = inlined_call_operand.vmem [shape: f32[8,32], index: 16, kind: output, shape index: {2}]
  %17 = xla_tuple %s14, %s15, %s16
  %s18 = sld [smem:[#allocation0]]
  $region82: #{lstm_estimator_forward.1} parent=0
    _
  %s20 = ssub.s32 1, %s18
  %s21 = scalar_select 0, %s20, %s18
  // Predicated region
  $region2: #{lstm_estimator_forward.1} parent=0 // pred_check
    _
  $region3: #{lstm_estimator_forward.1} parent=0 // pred_check_branch
    %23 = sbr.rel (0) target = $region5
  $region4: #{lstm_estimator_forward.1} parent=0 // pred_region
    _
  $region5: #{lstm_estimator_forward.1} parent=0 // pred_fallthru
    _
  // Predicated region
  $region6: #{lstm_estimator_forward.1} parent=0 // pred_check
    _
  $region7: #{lstm_estimator_forward.1} parent=0 // pred_check_branch
    %25 = sbr.rel (0) target = $region9
  $region8: #{lstm_estimator_forward.1} parent=0 // pred_region
    _
  $region9: #{lstm_estimator_forward.1} parent=0 // pred_fallthru
    _
  // Predicated region
  $region10: #{lstm_estimator_forward.1} parent=0 // pred_check
    _
  $region11: #{lstm_estimator_forward.1} parent=0 // pred_check_branch
    %27 = sbr.rel (0) target = $region13
  $region12: #{lstm_estimator_forward.1} parent=0 // pred_region
    _
  $region13: #{lstm_estimator_forward.1} parent=0 // pred_fallthru
    _
  // Predicated region
  $region14: #{lstm_estimator_forward.1} parent=0 // pred_check
    _
  $region15: #{lstm_estimator_forward.1} parent=0 // pred_check_branch
    %29 = sbr.rel (0) target = $region17
  $region16: #{lstm_estimator_forward.1} parent=0 // pred_region
    _
  $region17: #{lstm_estimator_forward.1} parent=0 // pred_fallthru
    _
  // Predicated region
  $region18: #{lstm_estimator_forward.1} parent=0 // pred_check
    _
  $region19: #{lstm_estimator_forward.1} parent=0 // pred_check_branch
    %31 = sbr.rel (0) target = $region21
  $region20: #{lstm_estimator_forward.1} parent=0 // pred_region
    _
  $region21: #{lstm_estimator_forward.1} parent=0 // pred_fallthru
    _
  // Predicated region
  $region22: #{lstm_estimator_forward.1} parent=0 // pred_check
    _
  $region23: #{lstm_estimator_forward.1} parent=0 // pred_check_branch
    %33 = sbr.rel (0) target = $region25
  $region24: #{lstm_estimator_forward.1} parent=0 // pred_region
    _
  $region25: #{lstm_estimator_forward.1} parent=0 // pred_fallthru
    _
  // Predicated region
  $region26: #{lstm_estimator_forward.1} parent=0 // pred_check
    _
  $region27: #{lstm_estimator_forward.1} parent=0 // pred_check_branch
    %35 = sbr.rel (0) target = $region29
  $region28: #{lstm_estimator_forward.1} parent=0 // pred_region
    _
  $region29: #{lstm_estimator_forward.1} parent=0 // pred_fallthru
    _
  // Predicated region
  $region30: #{lstm_estimator_forward.1} parent=0 // pred_check
    _
  $region31: #{lstm_estimator_forward.1} parent=0 // pred_check_branch
    %37 = sbr.rel (0) target = $region33
  $region32: #{lstm_estimator_forward.1} parent=0 // pred_region
    _
  $region33: #{lstm_estimator_forward.1} parent=0 // pred_fallthru
    _
  // Predicated region
  $region34: #{lstm_estimator_forward.1} parent=0 // pred_check
    _
  $region35: #{lstm_estimator_forward.1} parent=0 // pred_check_branch
    %39 = sbr.rel (0) target = $region37
  $region36: #{lstm_estimator_forward.1} parent=0 // pred_region
    _
  $region37: #{lstm_estimator_forward.1} parent=0 // pred_fallthru
    _
  // Predicated region
  $region38: #{lstm_estimator_forward.1} parent=0 // pred_check
    _
  $region39: #{lstm_estimator_forward.1} parent=0 // pred_check_branch
    %41 = sbr.rel (0) target = $region41
  $region40: #{lstm_estimator_forward.1} parent=0 // pred_region
    _
  $region41: #{lstm_estimator_forward.1} parent=0 // pred_fallthru
    _
  // Predicated region
  $region42: #{lstm_estimator_forward.1} parent=0 // pred_check
    _
  $region43: #{lstm_estimator_forward.1} parent=0 // pred_check_branch
    %43 = sbr.rel (0) target = $region45
  $region44: #{lstm_estimator_forward.1} parent=0 // pred_region
    _
  $region45: #{lstm_estimator_forward.1} parent=0 // pred_fallthru
    _
  // Predicated region
  $region46: #{lstm_estimator_forward.1} parent=0 // pred_check
    _
  $region47: #{lstm_estimator_forward.1} parent=0 // pred_check_branch
    %45 = sbr.rel (0) target = $region49
  $region48: #{lstm_estimator_forward.1} parent=0 // pred_region
    _
  $region49: #{lstm_estimator_forward.1} parent=0 // pred_fallthru
    _
  // Predicated region
  $region50: #{lstm_estimator_forward.1} parent=0 // pred_check
    _
  $region51: #{lstm_estimator_forward.1} parent=0 // pred_check_branch
    %47 = sbr.rel (0) target = $region53
  $region52: #{lstm_estimator_forward.1} parent=0 // pred_region
    _
  $region53: #{lstm_estimator_forward.1} parent=0 // pred_fallthru
    _
  // Predicated region
  $region54: #{lstm_estimator_forward.1} parent=0 // pred_check
    _
  $region55: #{lstm_estimator_forward.1} parent=0 // pred_check_branch
    %49 = sbr.rel (0) target = $region57
  $region56: #{lstm_estimator_forward.1} parent=0 // pred_region
    _
  $region57: #{lstm_estimator_forward.1} parent=0 // pred_fallthru
    _
  %v50 = vld [vmem:[%s0] sm:$0xff]
  %v51 = vld [vmem:[%s0 + $0x8] sm:$0xff]
  %v52 = vld [vmem:[%s0 + $0x10] sm:$0xff]
  %v53 = vld [vmem:[%s0 + $0x18] sm:$0xff]
  %v54 = vld [vmem:[%s0 + $0x20] sm:$0xff]
  %v55 = vld [vmem:[%s0 + $0x28] sm:$0xff]
  %v56 = vld [vmem:[%s0 + $0x30] sm:$0xff]
  %v57 = vld [vmem:[%s0 + $0x38] sm:$0xff]
  %v58 = vld [vmem:[%s1] sm:$0xff]
  %v59 = vld [vmem:[%s1 + $0x8] sm:$0xff]
  %v60 = vld [vmem:[%s1 + $0x10] sm:$0xff]
  %v61 = vld [vmem:[%s1 + $0x18] sm:$0xff]
  %v62 = vld [vmem:[%s1 + $0x20] sm:$0x3]
  %v63 = vld [vmem:[%s2] sm:$0x1]
  %v65 = vlaneseq
  %v66 = vshrl.u32 %v65, 7
  %v67 = vsub.s32 0, %v66
  %v68 = vrot.slane %v63, %v67
  %vm70 = vcmask 277504
  %v72 = vsel %vm70, %v50, 0
  %v75 = vsel %vm70, %v51, 0
  %v78 = vsel %vm70, %v52, 0
  %v81 = vsel %vm70, %v53, 0
  %v84 = vsel %vm70, %v54, 0
  %v87 = vsel %vm70, %v55, 0
  %v90 = vsel %vm70, %v56, 0
  %v93 = vsel %vm70, %v57, 0
  %vm95 = vcmask 1041408
  %v97 = vsel %vm95, %v62, 0
  %99 = vmatprep.subr.mxu0 0.0
  %100 = vmatpush1.msra.mxu0 %v58
  %101 = vmatprep.subr.mxu0 0.0
  %102 = vmatpush1.msra.mxu0 %v59
  %103 = vmatprep.subr.mxu0 0.0
  %104 = vmatpush1.msra.mxu0 %v60
  %105 = vmatprep.subr.mxu0 0.0
  %106 = vmatpush1.msra.mxu0 %v61
  %107 = vmatprep.subr.mxu0 0.0
  %108 = vmatpush1.msra.mxu0 %v97
  %109 = vmatprep.subr.mxu0 0.0
  %110 = vmatpush1.msra.mxu0 0.0
  %111 = vmatprep.subr.mxu0 0.0
  %112 = vmatpush1.msra.mxu0 0.0
  %113 = vmatprep.subr.mxu0 0.0
  %114 = vmatpush1.msra.mxu0 0.0
  %115 = vmatprep.subr.mxu0 0.0
  %116 = vmatpush1.msra.mxu0 0.0
  %117 = vmatprep.subr.mxu0 0.0
  %118 = vmatpush1.msra.mxu0 0.0
  %119 = vmatprep.subr.mxu0 0.0
  %120 = vmatpush1.msra.mxu0 0.0
  %121 = vmatprep.subr.mxu0 0.0
  %122 = vmatpush1.msra.mxu0 0.0
  %123 = vmatprep.subr.mxu0 0.0
  %124 = vmatpush1.msra.mxu0 0.0
  %125 = vmatprep.subr.mxu0 0.0
  %126 = vmatpush1.msra.mxu0 0.0
  %127 = vmatprep.subr.mxu0 0.0
  %128 = vmatpush1.msra.mxu0 0.0
  %129 = vmatprep.subr.mxu0 0.0
  %130 = vmatpush1.msra.mxu0 0.0
  %131 = vmatprep.subr.mxu0 0.0
  %132 = vmatpush1.msra.mxu0 0.0
  %133 = vmatprep.subr.mxu0 0.0
  %134 = vmatpush1.msra.mxu0 0.0
  %135 = vmatprep.subr.mxu0 0.0
  %136 = vmatpush1.msra.mxu0 0.0
  %137 = vmatprep.subr.mxu0 0.0
  %138 = vmatpush1.msra.mxu0 0.0
  %139 = vmatprep.subr.mxu0 0.0
  %140 = vmatpush1.msra.mxu0 0.0
  %141 = vmatprep.subr.mxu0 0.0
  %142 = vmatpush1.msra.mxu0 0.0
  %143 = vmatprep.subr.mxu0 0.0
  %144 = vmatpush1.msra.mxu0 0.0
  %145 = vmatprep.subr.mxu0 0.0
  %146 = vmatpush1.msra.mxu0 0.0
  %147 = vmatprep.subr.mxu0 0.0
  %148 = vmatpush1.msra.mxu0 0.0
  %149 = vmatprep.subr.mxu0 0.0
  %150 = vmatpush1.msra.mxu0 0.0
  %151 = vmatprep.subr.mxu0 0.0
  %152 = vmatpush1.msra.mxu0 0.0
  %153 = vmatprep.subr.mxu0 0.0
  %154 = vmatpush1.msra.mxu0 0.0
  %155 = vmatprep.subr.mxu0 0.0
  %156 = vmatpush1.msra.mxu0 0.0
  %157 = vmatprep.subr.mxu0 0.0
  %158 = vmatpush1.msra.mxu0 0.0
  %159 = vmatprep.subr.mxu0 0.0
  %160 = vmatpush1.msra.mxu0 0.0
  %161 = vmatprep.subr.mxu0 0.0
  %162 = vmatpush1.msra.mxu0 0.0
  %163 = vmatprep.mubr.f32.mxu0 0.0
  %164 = vmatmul.mubr.f32.gmra.mrb[0].mxu0 %v72
  %v165 = vpop.f32.mrb[0].mxu0
  %v166 = vadd.f32 %v68, %v165
  %v167 = vpop.f32.mrb[0].mxu0
  %168 = vmatprep.mubr.f32.mxu0 0.0
  %169 = vmatmul.mubr.f32.gmra.mrb[0].mxu0 %v75
  %v170 = vpop.f32.mrb[0].mxu0
  %v171 = vadd.f32 %v68, %v170
  %v172 = vpop.f32.mrb[0].mxu0
  %173 = vmatprep.mubr.f32.mxu0 0.0
  %174 = vmatmul.mubr.f32.gmra.mrb[0].mxu0 %v78
  %v175 = vpop.f32.mrb[0].mxu0
  %v176 = vadd.f32 %v68, %v175
  %v177 = vpop.f32.mrb[0].mxu0
  %178 = vmatprep.mubr.f32.mxu0 0.0
  %179 = vmatmul.mubr.f32.gmra.mrb[0].mxu0 %v81
  %v180 = vpop.f32.mrb[0].mxu0
  %v181 = vadd.f32 %v68, %v180
  %v182 = vpop.f32.mrb[0].mxu0
  %183 = vmatprep.mubr.f32.mxu0 0.0
  %184 = vmatmul.mubr.f32.gmra.mrb[0].mxu0 %v84
  %v185 = vpop.f32.mrb[0].mxu0
  %v186 = vadd.f32 %v68, %v185
  %v187 = vpop.f32.mrb[0].mxu0
  %188 = vmatprep.mubr.f32.mxu0 0.0
  %189 = vmatmul.mubr.f32.gmra.mrb[0].mxu0 %v87
  %v190 = vpop.f32.mrb[0].mxu0
  %v191 = vadd.f32 %v68, %v190
  %v192 = vpop.f32.mrb[0].mxu0
  %193 = vmatprep.mubr.f32.mxu0 0.0
  %194 = vmatmul.mubr.f32.gmra.mrb[0].mxu0 %v90
  %v195 = vpop.f32.mrb[0].mxu0
  %v196 = vadd.f32 %v68, %v195
  %v197 = vpop.f32.mrb[0].mxu0
  %198 = vmatprep.mubr.f32.mxu0 0.0
  %199 = vmatmul.mubr.f32.gmra.mrb[0].mxu0 %v93
  %v200 = vpop.f32.mrb[0].mxu0
  %v201 = vadd.f32 %v68, %v200
  %v202 = vpop.f32.mrb[0].mxu0
  %203 = vdwg.mxu0
  %v204 = vtanh.pop %v166
  %v205 = vtanh.pop %v171
  %v206 = vtanh.pop %v176
  %v207 = vtanh.pop %v181
  %v208 = vtanh.pop %v186
  %v209 = vtanh.pop %v191
  %v210 = vtanh.pop %v196
  %v211 = vtanh.pop %v201
  %v212 = vld [vmem:[%s3] sm:$0xff]
  %v213 = vld [vmem:[%s3 + $0x8] sm:$0xff]
  %v214 = vld [vmem:[%s3 + $0x10] sm:$0xff]
  %v215 = vld [vmem:[%s3 + $0x18] sm:$0xff]
  %v216 = vld [vmem:[%s4] sm:$0x1]
  %v218 = vlaneseq
  %v219 = vshrl.u32 %v218, 7
  %v220 = vsub.s32 0, %v219
  %v221 = vrot.slane %v216, %v220
  %vm223 = vcmask 261120
  %v225 = vsel %vm223, %v204, 0
  %v228 = vsel %vm223, %v205, 0
  %v231 = vsel %vm223, %v206, 0
  %v234 = vsel %vm223, %v207, 0
  %v237 = vsel %vm223, %v208, 0
  %v240 = vsel %vm223, %v209, 0
  %v243 = vsel %vm223, %v210, 0
  %v246 = vsel %vm223, %v211, 0
  %248 = vmatprep.subr.mxu0 0.0
  %249 = vmatpush1.msra.mxu0 %v212
  %250 = vmatprep.subr.mxu0 0.0
  %251 = vmatpush1.msra.mxu0 %v213
  %252 = vmatprep.subr.mxu0 0.0
  %253 = vmatpush1.msra.mxu0 %v214
  %254 = vmatprep.subr.mxu0 0.0
  %255 = vmatpush1.msra.mxu0 %v215
  %256 = vmatprep.subr.mxu0 0.0
  %257 = vmatpush1.msra.mxu0 0.0
  %258 = vmatprep.subr.mxu0 0.0
  %259 = vmatpush1.msra.mxu0 0.0
  %260 = vmatprep.subr.mxu0 0.0
  %261 = vmatpush1.msra.mxu0 0.0
  %262 = vmatprep.subr.mxu0 0.0
  %263 = vmatpush1.msra.mxu0 0.0
  %264 = vmatprep.subr.mxu0 0.0
  %265 = vmatpush1.msra.mxu0 0.0
  %266 = vmatprep.subr.mxu0 0.0
  %267 = vmatpush1.msra.mxu0 0.0
  %268 = vmatprep.subr.mxu0 0.0
  %269 = vmatpush1.msra.mxu0 0.0
  %270 = vmatprep.subr.mxu0 0.0
  %271 = vmatpush1.msra.mxu0 0.0
  %272 = vmatprep.subr.mxu0 0.0
  %273 = vmatpush1.msra.mxu0 0.0
  %274 = vmatprep.subr.mxu0 0.0
  %275 = vmatpush1.msra.mxu0 0.0
  %276 = vmatprep.subr.mxu0 0.0
  %277 = vmatpush1.msra.mxu0 0.0
  %278 = vmatprep.subr.mxu0 0.0
  %279 = vmatpush1.msra.mxu0 0.0
  %280 = vmatprep.subr.mxu0 0.0
  %281 = vmatpush1.msra.mxu0 0.0
  %282 = vmatprep.subr.mxu0 0.0
  %283 = vmatpush1.msra.mxu0 0.0
  %284 = vmatprep.subr.mxu0 0.0
  %285 = vmatpush1.msra.mxu0 0.0
  %286 = vmatprep.subr.mxu0 0.0
  %287 = vmatpush1.msra.mxu0 0.0
  %288 = vmatprep.subr.mxu0 0.0
  %289 = vmatpush1.msra.mxu0 0.0
  %290 = vmatprep.subr.mxu0 0.0
  %291 = vmatpush1.msra.mxu0 0.0
  %292 = vmatprep.subr.mxu0 0.0
  %293 = vmatpush1.msra.mxu0 0.0
  %294 = vmatprep.subr.mxu0 0.0
  %295 = vmatpush1.msra.mxu0 0.0
  %296 = vmatprep.subr.mxu0 0.0
  %297 = vmatpush1.msra.mxu0 0.0
  %298 = vmatprep.subr.mxu0 0.0
  %299 = vmatpush1.msra.mxu0 0.0
  %300 = vmatprep.subr.mxu0 0.0
  %301 = vmatpush1.msra.mxu0 0.0
  %302 = vmatprep.subr.mxu0 0.0
  %303 = vmatpush1.msra.mxu0 0.0
  %304 = vmatprep.subr.mxu0 0.0
  %305 = vmatpush1.msra.mxu0 0.0
  %306 = vmatprep.subr.mxu0 0.0
  %307 = vmatpush1.msra.mxu0 0.0
  %308 = vmatprep.subr.mxu0 0.0
  %309 = vmatpush1.msra.mxu0 0.0
  %310 = vmatprep.subr.mxu0 0.0
  %311 = vmatpush1.msra.mxu0 0.0
  %312 = vmatprep.mubr.f32.mxu0 0.0
  %313 = vmatmul.mubr.f32.gmra.mrb[0].mxu0 %v225
  %v314 = vpop.f32.mrb[0].mxu0
  %v315 = vadd.f32 %v221, %v314
  %v316 = vpop.f32.mrb[0].mxu0
  %317 = vmatprep.mubr.f32.mxu0 0.0
  %318 = vmatmul.mubr.f32.gmra.mrb[0].mxu0 %v228
  %v319 = vpop.f32.mrb[0].mxu0
  %v320 = vadd.f32 %v221, %v319
  %v321 = vpop.f32.mrb[0].mxu0
  %322 = vmatprep.mubr.f32.mxu0 0.0
  %323 = vmatmul.mubr.f32.gmra.mrb[0].mxu0 %v231
  %v324 = vpop.f32.mrb[0].mxu0
  %v325 = vadd.f32 %v221, %v324
  %v326 = vpop.f32.mrb[0].mxu0
  %327 = vmatprep.mubr.f32.mxu0 0.0
  %328 = vmatmul.mubr.f32.gmra.mrb[0].mxu0 %v234
  %v329 = vpop.f32.mrb[0].mxu0
  %v330 = vadd.f32 %v221, %v329
  %v331 = vpop.f32.mrb[0].mxu0
  %332 = vmatprep.mubr.f32.mxu0 0.0
  %333 = vmatmul.mubr.f32.gmra.mrb[0].mxu0 %v237
  %v334 = vpop.f32.mrb[0].mxu0
  %v335 = vadd.f32 %v221, %v334
  %v336 = vpop.f32.mrb[0].mxu0
  %337 = vmatprep.mubr.f32.mxu0 0.0
  %338 = vmatmul.mubr.f32.gmra.mrb[0].mxu0 %v240
  %v339 = vpop.f32.mrb[0].mxu0
  %v340 = vadd.f32 %v221, %v339
  %v341 = vpop.f32.mrb[0].mxu0
  %342 = vmatprep.mubr.f32.mxu0 0.0
  %343 = vmatmul.mubr.f32.gmra.mrb[0].mxu0 %v243
  %v344 = vpop.f32.mrb[0].mxu0
  %v345 = vadd.f32 %v221, %v344
  %v346 = vpop.f32.mrb[0].mxu0
  %347 = vmatprep.mubr.f32.mxu0 0.0
  %348 = vmatmul.mubr.f32.gmra.mrb[0].mxu0 %v246
  %v349 = vpop.f32.mrb[0].mxu0
  %v350 = vadd.f32 %v221, %v349
  %v351 = vpop.f32.mrb[0].mxu0
  %352 = vdwg.mxu0
  %v353 = vtanh.pop %v315
  %v354 = vtanh.pop %v320
  %v355 = vtanh.pop %v325
  %v356 = vtanh.pop %v330
  %v357 = vtanh.pop %v335
  %v358 = vtanh.pop %v340
  %v359 = vtanh.pop %v345
  %v360 = vtanh.pop %v350
  %v361 = vld [vmem:[%s5] sm:$0xff]
  %v362 = vld [vmem:[%s5 + $0x8] sm:$0xff]
  %v363 = vld [vmem:[%s5 + $0x10] sm:$0xff]
  %v364 = vld [vmem:[%s5 + $0x18] sm:$0xff]
  %v365 = vld [vmem:[%s7] sm:$0x1]
  %v367 = vlaneseq
  %v368 = vshrl.u32 %v367, 7
  %v369 = vsub.s32 0, %v368
  %v370 = vrot.slane %v365, %v369
  %v373 = vsel %vm223, %v353, 0
  %v376 = vsel %vm223, %v354, 0
  %v379 = vsel %vm223, %v355, 0
  %v382 = vsel %vm223, %v356, 0
  %v385 = vsel %vm223, %v357, 0
  %v388 = vsel %vm223, %v358, 0
  %v391 = vsel %vm223, %v359, 0
  %v394 = vsel %vm223, %v360, 0
  %396 = vmatprep.subr.mxu0 0.0
  %397 = vmatpush1.msra.mxu0 %v361
  %398 = vmatprep.subr.mxu0 0.0
  %399 = vmatpush1.msra.mxu0 %v362
  %400 = vmatprep.subr.mxu0 0.0
  %401 = vmatpush1.msra.mxu0 %v363
  %402 = vmatprep.subr.mxu0 0.0
  %403 = vmatpush1.msra.mxu0 %v364
  %404 = vmatprep.subr.mxu0 0.0
  %405 = vmatpush1.msra.mxu0 0.0
  %406 = vmatprep.subr.mxu0 0.0
  %407 = vmatpush1.msra.mxu0 0.0
  %408 = vmatprep.subr.mxu0 0.0
  %409 = vmatpush1.msra.mxu0 0.0
  %410 = vmatprep.subr.mxu0 0.0
  %411 = vmatpush1.msra.mxu0 0.0
  %412 = vmatprep.subr.mxu0 0.0
  %413 = vmatpush1.msra.mxu0 0.0
  %414 = vmatprep.subr.mxu0 0.0
  %415 = vmatpush1.msra.mxu0 0.0
  %416 = vmatprep.subr.mxu0 0.0
  %417 = vmatpush1.msra.mxu0 0.0
  %418 = vmatprep.subr.mxu0 0.0
  %419 = vmatpush1.msra.mxu0 0.0
  %420 = vmatprep.subr.mxu0 0.0
  %421 = vmatpush1.msra.mxu0 0.0
  %422 = vmatprep.subr.mxu0 0.0
  %423 = vmatpush1.msra.mxu0 0.0
  %424 = vmatprep.subr.mxu0 0.0
  %425 = vmatpush1.msra.mxu0 0.0
  %426 = vmatprep.subr.mxu0 0.0
  %427 = vmatpush1.msra.mxu0 0.0
  %428 = vmatprep.subr.mxu0 0.0
  %429 = vmatpush1.msra.mxu0 0.0
  %430 = vmatprep.subr.mxu0 0.0
  %431 = vmatpush1.msra.mxu0 0.0
  %432 = vmatprep.subr.mxu0 0.0
  %433 = vmatpush1.msra.mxu0 0.0
  %434 = vmatprep.subr.mxu0 0.0
  %435 = vmatpush1.msra.mxu0 0.0
  %436 = vmatprep.subr.mxu0 0.0
  %437 = vmatpush1.msra.mxu0 0.0
  %438 = vmatprep.subr.mxu0 0.0
  %439 = vmatpush1.msra.mxu0 0.0
  %440 = vmatprep.subr.mxu0 0.0
  %441 = vmatpush1.msra.mxu0 0.0
  %442 = vmatprep.subr.mxu0 0.0
  %443 = vmatpush1.msra.mxu0 0.0
  %444 = vmatprep.subr.mxu0 0.0
  %445 = vmatpush1.msra.mxu0 0.0
  %446 = vmatprep.subr.mxu0 0.0
  %447 = vmatpush1.msra.mxu0 0.0
  %448 = vmatprep.subr.mxu0 0.0
  %449 = vmatpush1.msra.mxu0 0.0
  %450 = vmatprep.subr.mxu0 0.0
  %451 = vmatpush1.msra.mxu0 0.0
  %452 = vmatprep.subr.mxu0 0.0
  %453 = vmatpush1.msra.mxu0 0.0
  %454 = vmatprep.subr.mxu0 0.0
  %455 = vmatpush1.msra.mxu0 0.0
  %456 = vmatprep.subr.mxu0 0.0
  %457 = vmatpush1.msra.mxu0 0.0
  %458 = vmatprep.subr.mxu0 0.0
  %459 = vmatpush1.msra.mxu0 0.0
  %460 = vmatprep.mubr.f32.mxu0 0.0
  %461 = vmatmul.mubr.f32.gmra.mrb[0].mxu0 %v373
  %v462 = vpop.f32.mrb[0].mxu0
  %v463 = vadd.f32 %v370, %v462
  %v464 = vpop.f32.mrb[0].mxu0
  %465 = vmatprep.mubr.f32.mxu0 0.0
  %466 = vmatmul.mubr.f32.gmra.mrb[0].mxu0 %v376
  %v467 = vpop.f32.mrb[0].mxu0
  %v468 = vadd.f32 %v370, %v467
  %v469 = vpop.f32.mrb[0].mxu0
  %470 = vmatprep.mubr.f32.mxu0 0.0
  %471 = vmatmul.mubr.f32.gmra.mrb[0].mxu0 %v379
  %v472 = vpop.f32.mrb[0].mxu0
  %v473 = vadd.f32 %v370, %v472
  %v474 = vpop.f32.mrb[0].mxu0
  %475 = vmatprep.mubr.f32.mxu0 0.0
  %476 = vmatmul.mubr.f32.gmra.mrb[0].mxu0 %v382
  %v477 = vpop.f32.mrb[0].mxu0
  %v478 = vadd.f32 %v370, %v477
  %v479 = vpop.f32.mrb[0].mxu0
  %480 = vmatprep.mubr.f32.mxu0 0.0
  %481 = vmatmul.mubr.f32.gmra.mrb[0].mxu0 %v385
  %v482 = vpop.f32.mrb[0].mxu0
  %v483 = vadd.f32 %v370, %v482
  %v484 = vpop.f32.mrb[0].mxu0
  %485 = vmatprep.mubr.f32.mxu0 0.0
  %486 = vmatmul.mubr.f32.gmra.mrb[0].mxu0 %v388
  %v487 = vpop.f32.mrb[0].mxu0
  %v488 = vadd.f32 %v370, %v487
  %v489 = vpop.f32.mrb[0].mxu0
  %490 = vmatprep.mubr.f32.mxu0 0.0
  %491 = vmatmul.mubr.f32.gmra.mrb[0].mxu0 %v391
  %v492 = vpop.f32.mrb[0].mxu0
  %v493 = vadd.f32 %v370, %v492
  %v494 = vpop.f32.mrb[0].mxu0
  %495 = vmatprep.mubr.f32.mxu0 0.0
  %496 = vmatmul.mubr.f32.gmra.mrb[0].mxu0 %v394
  %v497 = vpop.f32.mrb[0].mxu0
  %v498 = vadd.f32 %v370, %v497
  %v499 = vpop.f32.mrb[0].mxu0
  %500 = vdwg.mxu0
  %v501 = vld [vmem:[%s6] sm:$0xff]
  %v502 = vld [vmem:[%s6 + $0x8] sm:$0xff]
  %v503 = vld [vmem:[%s6 + $0x10] sm:$0xff]
  %v504 = vld [vmem:[%s6 + $0x18] sm:$0xff]
  %v505 = vld [vmem:[%s12] sm:$0xff]
  %v506 = vld [vmem:[%s13] sm:$0xff]
  %v507 = vlaneseq
  %v508 = vand.u32 %v507, 127
  %vm509 = vcmp.lt.s32.totalorder %v508, 96
  %v510 = vsel %vm509, 0.5, 1.0
  %v512 = vsel %vm223, %v505, 0
  %514 = vmatprep.subr.mxu0 0.0
  %515 = vmatpush1.msra.mxu0 %v501
  %516 = vmatprep.subr.mxu0 0.0
  %517 = vmatpush1.msra.mxu0 %v502
  %518 = vmatprep.subr.mxu0 0.0
  %519 = vmatpush1.msra.mxu0 %v503
  %520 = vmatprep.subr.mxu0 0.0
  %521 = vmatpush1.msra.mxu0 %v504
  %522 = vmatprep.subr.mxu0 0.0
  %523 = vmatpush1.msra.mxu0 0.0
  %524 = vmatprep.subr.mxu0 0.0
  %525 = vmatpush1.msra.mxu0 0.0
  %526 = vmatprep.subr.mxu0 0.0
  %527 = vmatpush1.msra.mxu0 0.0
  %528 = vmatprep.subr.mxu0 0.0
  %529 = vmatpush1.msra.mxu0 0.0
  %530 = vmatprep.subr.mxu0 0.0
  %531 = vmatpush1.msra.mxu0 0.0
  %532 = vmatprep.subr.mxu0 0.0
  %533 = vmatpush1.msra.mxu0 0.0
  %534 = vmatprep.subr.mxu0 0.0
  %535 = vmatpush1.msra.mxu0 0.0
  %536 = vmatprep.subr.mxu0 0.0
  %537 = vmatpush1.msra.mxu0 0.0
  %538 = vmatprep.subr.mxu0 0.0
  %539 = vmatpush1.msra.mxu0 0.0
  %540 = vmatprep.subr.mxu0 0.0
  %541 = vmatpush1.msra.mxu0 0.0
  %542 = vmatprep.subr.mxu0 0.0
  %543 = vmatpush1.msra.mxu0 0.0
  %544 = vmatprep.subr.mxu0 0.0
  %545 = vmatpush1.msra.mxu0 0.0
  %546 = vmatprep.subr.mxu0 0.0
  %547 = vmatpush1.msra.mxu0 0.0
  %548 = vmatprep.subr.mxu0 0.0
  %549 = vmatpush1.msra.mxu0 0.0
  %550 = vmatprep.subr.mxu0 0.0
  %551 = vmatpush1.msra.mxu0 0.0
  %552 = vmatprep.subr.mxu0 0.0
  %553 = vmatpush1.msra.mxu0 0.0
  %554 = vmatprep.subr.mxu0 0.0
  %555 = vmatpush1.msra.mxu0 0.0
  %556 = vmatprep.subr.mxu0 0.0
  %557 = vmatpush1.msra.mxu0 0.0
  %558 = vmatprep.subr.mxu0 0.0
  %559 = vmatpush1.msra.mxu0 0.0
  %560 = vmatprep.subr.mxu0 0.0
  %561 = vmatpush1.msra.mxu0 0.0
  %562 = vmatprep.subr.mxu0 0.0
  %563 = vmatpush1.msra.mxu0 0.0
  %564 = vmatprep.subr.mxu0 0.0
  %565 = vmatpush1.msra.mxu0 0.0
  %566 = vmatprep.subr.mxu0 0.0
  %567 = vmatpush1.msra.mxu0 0.0
  %568 = vmatprep.subr.mxu0 0.0
  %569 = vmatpush1.msra.mxu0 0.0
  %570 = vmatprep.subr.mxu0 0.0
  %571 = vmatpush1.msra.mxu0 0.0
  %572 = vmatprep.subr.mxu0 0.0
  %573 = vmatpush1.msra.mxu0 0.0
  %574 = vmatprep.subr.mxu0 0.0
  %575 = vmatpush1.msra.mxu0 0.0
  %576 = vmatprep.subr.mxu0 0.0
  %577 = vmatpush1.msra.mxu0 0.0
  %578 = vmatprep.mubr.f32.mxu0 0.0
  %579 = vmatmul.mubr.f32.gmra.mrb[0].mxu0 %v512
  %v580 = vpop.f32.mrb[0].mxu0
  %v581 = vadd.f32 0.0, %v580
  %v582 = vpop.f32.mrb[0].mxu0
  %583 = vdwg.mxu0
  %v584 = vadd.f32 %v463, %v581
  %v585 = vmul.f32 %v584, %v510
  %v586 = vtanh.pop %v585
  %v587 = vmul.f32 %v586, 0.5
  %v588 = vadd.f32 %v587, 0.5
  %590 = vrot.lane.b32.xlu0 %v506, 32
  %v591 = vpop.permute.xlu0 %590
  %v593 = vmul.f32 %v588, %v591
  %595 = vrot.lane.b32.xlu0 %v586, 32
  %v596 = vpop.permute.xlu0 %595
  %v598 = vmul.f32 %v588, %v596
  %600 = vrot.lane.b32.xlu0 %v598, 32
  %v601 = vpop.permute.xlu0 %600
  %v603 = vadd.f32 %v593, %v601
  %v604 = vtanh.pop %v603
  %606 = vrot.lane.b32.xlu0 %v604, 32
  %v607 = vpop.permute.xlu0 %606
  %v609 = vmul.f32 %v588, %v607
  %611 = vrot.lane.b32.xlu0 %v609, 64
  %v612 = vpop.permute.xlu0 %611
  %v613 = vsel %vm223, %v612, 0
  %615 = vmatprep.subr.mxu0 0.0
  %616 = vmatpush1.msra.mxu0 %v501
  %617 = vmatprep.subr.mxu0 0.0
  %618 = vmatpush1.msra.mxu0 %v502
  %619 = vmatprep.subr.mxu0 0.0
  %620 = vmatpush1.msra.mxu0 %v503
  %621 = vmatprep.subr.mxu0 0.0
  %622 = vmatpush1.msra.mxu0 %v504
  %623 = vmatprep.subr.mxu0 0.0
  %624 = vmatpush1.msra.mxu0 0.0
  %625 = vmatprep.subr.mxu0 0.0
  %626 = vmatpush1.msra.mxu0 0.0
  %627 = vmatprep.subr.mxu0 0.0
  %628 = vmatpush1.msra.mxu0 0.0
  %629 = vmatprep.subr.mxu0 0.0
  %630 = vmatpush1.msra.mxu0 0.0
  %631 = vmatprep.subr.mxu0 0.0
  %632 = vmatpush1.msra.mxu0 0.0
  %633 = vmatprep.subr.mxu0 0.0
  %634 = vmatpush1.msra.mxu0 0.0
  %635 = vmatprep.subr.mxu0 0.0
  %636 = vmatpush1.msra.mxu0 0.0
  %637 = vmatprep.subr.mxu0 0.0
  %638 = vmatpush1.msra.mxu0 0.0
  %639 = vmatprep.subr.mxu0 0.0
  %640 = vmatpush1.msra.mxu0 0.0
  %641 = vmatprep.subr.mxu0 0.0
  %642 = vmatpush1.msra.mxu0 0.0
  %643 = vmatprep.subr.mxu0 0.0
  %644 = vmatpush1.msra.mxu0 0.0
  %645 = vmatprep.subr.mxu0 0.0
  %646 = vmatpush1.msra.mxu0 0.0
  %647 = vmatprep.subr.mxu0 0.0
  %648 = vmatpush1.msra.mxu0 0.0
  %649 = vmatprep.subr.mxu0 0.0
  %650 = vmatpush1.msra.mxu0 0.0
  %651 = vmatprep.subr.mxu0 0.0
  %652 = vmatpush1.msra.mxu0 0.0
  %653 = vmatprep.subr.mxu0 0.0
  %654 = vmatpush1.msra.mxu0 0.0
  %655 = vmatprep.subr.mxu0 0.0
  %656 = vmatpush1.msra.mxu0 0.0
  %657 = vmatprep.subr.mxu0 0.0
  %658 = vmatpush1.msra.mxu0 0.0
  %659 = vmatprep.subr.mxu0 0.0
  %660 = vmatpush1.msra.mxu0 0.0
  %661 = vmatprep.subr.mxu0 0.0
  %662 = vmatpush1.msra.mxu0 0.0
  %663 = vmatprep.subr.mxu0 0.0
  %664 = vmatpush1.msra.mxu0 0.0
  %665 = vmatprep.subr.mxu0 0.0
  %666 = vmatpush1.msra.mxu0 0.0
  %667 = vmatprep.subr.mxu0 0.0
  %668 = vmatpush1.msra.mxu0 0.0
  %669 = vmatprep.subr.mxu0 0.0
  %670 = vmatpush1.msra.mxu0 0.0
  %671 = vmatprep.subr.mxu0 0.0
  %672 = vmatpush1.msra.mxu0 0.0
  %673 = vmatprep.subr.mxu0 0.0
  %674 = vmatpush1.msra.mxu0 0.0
  %675 = vmatprep.subr.mxu0 0.0
  %676 = vmatpush1.msra.mxu0 0.0
  %677 = vmatprep.subr.mxu0 0.0
  %678 = vmatpush1.msra.mxu0 0.0
  %679 = vmatprep.mubr.f32.mxu0 0.0
  %680 = vmatmul.mubr.f32.gmra.mrb[0].mxu0 %v613
  %v681 = vpop.f32.mrb[0].mxu0
  %v682 = vadd.f32 0.0, %v681
  %v683 = vpop.f32.mrb[0].mxu0
  %684 = vdwg.mxu0
  %v685 = vadd.f32 %v468, %v682
  %v686 = vmul.f32 %v685, %v510
  %v687 = vtanh.pop %v686
  %v688 = vmul.f32 %v687, 0.5
  %v689 = vadd.f32 %v688, 0.5
  %v690 = vmul.f32 %v689, %v603
  %692 = vrot.lane.b32.xlu0 %v687, 32
  %v693 = vpop.permute.xlu0 %692
  %v695 = vmul.f32 %v689, %v693
  %697 = vrot.lane.b32.xlu0 %v695, 32
  %v698 = vpop.permute.xlu0 %697
  %v700 = vadd.f32 %v690, %v698
  %v701 = vtanh.pop %v700
  %703 = vrot.lane.b32.xlu0 %v701, 32
  %v704 = vpop.permute.xlu0 %703
  %v706 = vmul.f32 %v689, %v704
  %708 = vrot.lane.b32.xlu0 %v706, 64
  %v709 = vpop.permute.xlu0 %708
  %v710 = vsel %vm223, %v709, 0
  %712 = vmatprep.subr.mxu0 0.0
  %713 = vmatpush1.msra.mxu0 %v501
  %714 = vmatprep.subr.mxu0 0.0
  %715 = vmatpush1.msra.mxu0 %v502
  %716 = vmatprep.subr.mxu0 0.0
  %717 = vmatpush1.msra.mxu0 %v503
  %718 = vmatprep.subr.mxu0 0.0
  %719 = vmatpush1.msra.mxu0 %v504
  %720 = vmatprep.subr.mxu0 0.0
  %721 = vmatpush1.msra.mxu0 0.0
  %722 = vmatprep.subr.mxu0 0.0
  %723 = vmatpush1.msra.mxu0 0.0
  %724 = vmatprep.subr.mxu0 0.0
  %725 = vmatpush1.msra.mxu0 0.0
  %726 = vmatprep.subr.mxu0 0.0
  %727 = vmatpush1.msra.mxu0 0.0
  %728 = vmatprep.subr.mxu0 0.0
  %729 = vmatpush1.msra.mxu0 0.0
  %730 = vmatprep.subr.mxu0 0.0
  %731 = vmatpush1.msra.mxu0 0.0
  %732 = vmatprep.subr.mxu0 0.0
  %733 = vmatpush1.msra.mxu0 0.0
  %734 = vmatprep.subr.mxu0 0.0
  %735 = vmatpush1.msra.mxu0 0.0
  %736 = vmatprep.subr.mxu0 0.0
  %737 = vmatpush1.msra.mxu0 0.0
  %738 = vmatprep.subr.mxu0 0.0
  %739 = vmatpush1.msra.mxu0 0.0
  %740 = vmatprep.subr.mxu0 0.0
  %741 = vmatpush1.msra.mxu0 0.0
  %742 = vmatprep.subr.mxu0 0.0
  %743 = vmatpush1.msra.mxu0 0.0
  %744 = vmatprep.subr.mxu0 0.0
  %745 = vmatpush1.msra.mxu0 0.0
  %746 = vmatprep.subr.mxu0 0.0
  %747 = vmatpush1.msra.mxu0 0.0
  %748 = vmatprep.subr.mxu0 0.0
  %749 = vmatpush1.msra.mxu0 0.0
  %750 = vmatprep.subr.mxu0 0.0
  %751 = vmatpush1.msra.mxu0 0.0
  %752 = vmatprep.subr.mxu0 0.0
  %753 = vmatpush1.msra.mxu0 0.0
  %754 = vmatprep.subr.mxu0 0.0
  %755 = vmatpush1.msra.mxu0 0.0
  %756 = vmatprep.subr.mxu0 0.0
  %757 = vmatpush1.msra.mxu0 0.0
  %758 = vmatprep.subr.mxu0 0.0
  %759 = vmatpush1.msra.mxu0 0.0
  %760 = vmatprep.subr.mxu0 0.0
  %761 = vmatpush1.msra.mxu0 0.0
  %762 = vmatprep.subr.mxu0 0.0
  %763 = vmatpush1.msra.mxu0 0.0
  %764 = vmatprep.subr.mxu0 0.0
  %765 = vmatpush1.msra.mxu0 0.0
  %766 = vmatprep.subr.mxu0 0.0
  %767 = vmatpush1.msra.mxu0 0.0
  %768 = vmatprep.subr.mxu0 0.0
  %769 = vmatpush1.msra.mxu0 0.0
  %770 = vmatprep.subr.mxu0 0.0
  %771 = vmatpush1.msra.mxu0 0.0
  %772 = vmatprep.subr.mxu0 0.0
  %773 = vmatpush1.msra.mxu0 0.0
  %774 = vmatprep.subr.mxu0 0.0
  %775 = vmatpush1.msra.mxu0 0.0
  %776 = vmatprep.mubr.f32.mxu0 0.0
  %777 = vmatmul.mubr.f32.gmra.mrb[0].mxu0 %v710
  %v778 = vpop.f32.mrb[0].mxu0
  %v779 = vadd.f32 0.0, %v778
  %v780 = vpop.f32.mrb[0].mxu0
  %781 = vdwg.mxu0
  %v782 = vadd.f32 %v473, %v779
  %v783 = vmul.f32 %v782, %v510
  %v784 = vtanh.pop %v783
  %v785 = vmul.f32 %v784, 0.5
  %v786 = vadd.f32 %v785, 0.5
  %v787 = vmul.f32 %v786, %v700
  %789 = vrot.lane.b32.xlu0 %v784, 32
  %v790 = vpop.permute.xlu0 %789
  %v792 = vmul.f32 %v786, %v790
  %794 = vrot.lane.b32.xlu0 %v792, 32
  %v795 = vpop.permute.xlu0 %794
  %v797 = vadd.f32 %v787, %v795
  %v798 = vtanh.pop %v797
  %800 = vrot.lane.b32.xlu0 %v798, 32
  %v801 = vpop.permute.xlu0 %800
  %v803 = vmul.f32 %v786, %v801
  %805 = vrot.lane.b32.xlu0 %v803, 64
  %v806 = vpop.permute.xlu0 %805
  %v807 = vsel %vm223, %v806, 0
  %809 = vmatprep.subr.mxu0 0.0
  %810 = vmatpush1.msra.mxu0 %v501
  %811 = vmatprep.subr.mxu0 0.0
  %812 = vmatpush1.msra.mxu0 %v502
  %813 = vmatprep.subr.mxu0 0.0
  %814 = vmatpush1.msra.mxu0 %v503
  %815 = vmatprep.subr.mxu0 0.0
  %816 = vmatpush1.msra.mxu0 %v504
  %817 = vmatprep.subr.mxu0 0.0
  %818 = vmatpush1.msra.mxu0 0.0
  %819 = vmatprep.subr.mxu0 0.0
  %820 = vmatpush1.msra.mxu0 0.0
  %821 = vmatprep.subr.mxu0 0.0
  %822 = vmatpush1.msra.mxu0 0.0
  %823 = vmatprep.subr.mxu0 0.0
  %824 = vmatpush1.msra.mxu0 0.0
  %825 = vmatprep.subr.mxu0 0.0
  %826 = vmatpush1.msra.mxu0 0.0
  %827 = vmatprep.subr.mxu0 0.0
  %828 = vmatpush1.msra.mxu0 0.0
  %829 = vmatprep.subr.mxu0 0.0
  %830 = vmatpush1.msra.mxu0 0.0
  %831 = vmatprep.subr.mxu0 0.0
  %832 = vmatpush1.msra.mxu0 0.0
  %833 = vmatprep.subr.mxu0 0.0
  %834 = vmatpush1.msra.mxu0 0.0
  %835 = vmatprep.subr.mxu0 0.0
  %836 = vmatpush1.msra.mxu0 0.0
  %837 = vmatprep.subr.mxu0 0.0
  %838 = vmatpush1.msra.mxu0 0.0
  %839 = vmatprep.subr.mxu0 0.0
  %840 = vmatpush1.msra.mxu0 0.0
  %841 = vmatprep.subr.mxu0 0.0
  %842 = vmatpush1.msra.mxu0 0.0
  %843 = vmatprep.subr.mxu0 0.0
  %844 = vmatpush1.msra.mxu0 0.0
  %845 = vmatprep.subr.mxu0 0.0
  %846 = vmatpush1.msra.mxu0 0.0
  %847 = vmatprep.subr.mxu0 0.0
  %848 = vmatpush1.msra.mxu0 0.0
  %849 = vmatprep.subr.mxu0 0.0
  %850 = vmatpush1.msra.mxu0 0.0
  %851 = vmatprep.subr.mxu0 0.0
  %852 = vmatpush1.msra.mxu0 0.0
  %853 = vmatprep.subr.mxu0 0.0
  %854 = vmatpush1.msra.mxu0 0.0
  %855 = vmatprep.subr.mxu0 0.0
  %856 = vmatpush1.msra.mxu0 0.0
  %857 = vmatprep.subr.mxu0 0.0
  %858 = vmatpush1.msra.mxu0 0.0
  %859 = vmatprep.subr.mxu0 0.0
  %860 = vmatpush1.msra.mxu0 0.0
  %861 = vmatprep.subr.mxu0 0.0
  %862 = vmatpush1.msra.mxu0 0.0
  %863 = vmatprep.subr.mxu0 0.0
  %864 = vmatpush1.msra.mxu0 0.0
  %865 = vmatprep.subr.mxu0 0.0
  %866 = vmatpush1.msra.mxu0 0.0
  %867 = vmatprep.subr.mxu0 0.0
  %868 = vmatpush1.msra.mxu0 0.0
  %869 = vmatprep.subr.mxu0 0.0
  %870 = vmatpush1.msra.mxu0 0.0
  %871 = vmatprep.subr.mxu0 0.0
  %872 = vmatpush1.msra.mxu0 0.0
  %873 = vmatprep.mubr.f32.mxu0 0.0
  %874 = vmatmul.mubr.f32.gmra.mrb[0].mxu0 %v807
  %v875 = vpop.f32.mrb[0].mxu0
  %v876 = vadd.f32 0.0, %v875
  %v877 = vpop.f32.mrb[0].mxu0
  %878 = vdwg.mxu0
  %v879 = vadd.f32 %v478, %v876
  %v880 = vmul.f32 %v879, %v510
  %v881 = vtanh.pop %v880
  %v882 = vmul.f32 %v881, 0.5
  %v883 = vadd.f32 %v882, 0.5
  %v884 = vmul.f32 %v883, %v797
  %886 = vrot.lane.b32.xlu0 %v881, 32
  %v887 = vpop.permute.xlu0 %886
  %v889 = vmul.f32 %v883, %v887
  %891 = vrot.lane.b32.xlu0 %v889, 32
  %v892 = vpop.permute.xlu0 %891
  %v894 = vadd.f32 %v884, %v892
  %v895 = vtanh.pop %v894
  %897 = vrot.lane.b32.xlu0 %v895, 32
  %v898 = vpop.permute.xlu0 %897
  %v900 = vmul.f32 %v883, %v898
  %902 = vrot.lane.b32.xlu0 %v900, 64
  %v903 = vpop.permute.xlu0 %902
  %v904 = vsel %vm223, %v903, 0
  %906 = vmatprep.subr.mxu0 0.0
  %907 = vmatpush1.msra.mxu0 %v501
  %908 = vmatprep.subr.mxu0 0.0
  %909 = vmatpush1.msra.mxu0 %v502
  %910 = vmatprep.subr.mxu0 0.0
  %911 = vmatpush1.msra.mxu0 %v503
  %912 = vmatprep.subr.mxu0 0.0
  %913 = vmatpush1.msra.mxu0 %v504
  %914 = vmatprep.subr.mxu0 0.0
  %915 = vmatpush1.msra.mxu0 0.0
  %916 = vmatprep.subr.mxu0 0.0
  %917 = vmatpush1.msra.mxu0 0.0
  %918 = vmatprep.subr.mxu0 0.0
  %919 = vmatpush1.msra.mxu0 0.0
  %920 = vmatprep.subr.mxu0 0.0
  %921 = vmatpush1.msra.mxu0 0.0
  %922 = vmatprep.subr.mxu0 0.0
  %923 = vmatpush1.msra.mxu0 0.0
  %924 = vmatprep.subr.mxu0 0.0
  %925 = vmatpush1.msra.mxu0 0.0
  %926 = vmatprep.subr.mxu0 0.0
  %927 = vmatpush1.msra.mxu0 0.0
  %928 = vmatprep.subr.mxu0 0.0
  %929 = vmatpush1.msra.mxu0 0.0
  %930 = vmatprep.subr.mxu0 0.0
  %931 = vmatpush1.msra.mxu0 0.0
  %932 = vmatprep.subr.mxu0 0.0
  %933 = vmatpush1.msra.mxu0 0.0
  %934 = vmatprep.subr.mxu0 0.0
  %935 = vmatpush1.msra.mxu0 0.0
  %936 = vmatprep.subr.mxu0 0.0
  %937 = vmatpush1.msra.mxu0 0.0
  %938 = vmatprep.subr.mxu0 0.0
  %939 = vmatpush1.msra.mxu0 0.0
  %940 = vmatprep.subr.mxu0 0.0
  %941 = vmatpush1.msra.mxu0 0.0
  %942 = vmatprep.subr.mxu0 0.0
  %943 = vmatpush1.msra.mxu0 0.0
  %944 = vmatprep.subr.mxu0 0.0
  %945 = vmatpush1.msra.mxu0 0.0
  %946 = vmatprep.subr.mxu0 0.0
  %947 = vmatpush1.msra.mxu0 0.0
  %948 = vmatprep.subr.mxu0 0.0
  %949 = vmatpush1.msra.mxu0 0.0
  %950 = vmatprep.subr.mxu0 0.0
  %951 = vmatpush1.msra.mxu0 0.0
  %952 = vmatprep.subr.mxu0 0.0
  %953 = vmatpush1.msra.mxu0 0.0
  %954 = vmatprep.subr.mxu0 0.0
  %955 = vmatpush1.msra.mxu0 0.0
  %956 = vmatprep.subr.mxu0 0.0
  %957 = vmatpush1.msra.mxu0 0.0
  %958 = vmatprep.subr.mxu0 0.0
  %959 = vmatpush1.msra.mxu0 0.0
  %960 = vmatprep.subr.mxu0 0.0
  %961 = vmatpush1.msra.mxu0 0.0
  %962 = vmatprep.subr.mxu0 0.0
  %963 = vmatpush1.msra.mxu0 0.0
  %964 = vmatprep.subr.mxu0 0.0
  %965 = vmatpush1.msra.mxu0 0.0
  %966 = vmatprep.subr.mxu0 0.0
  %967 = vmatpush1.msra.mxu0 0.0
  %968 = vmatprep.subr.mxu0 0.0
  %969 = vmatpush1.msra.mxu0 0.0
  %970 = vmatprep.mubr.f32.mxu0 0.0
  %971 = vmatmul.mubr.f32.gmra.mrb[0].mxu0 %v904
  %v972 = vpop.f32.mrb[0].mxu0
  %v973 = vadd.f32 0.0, %v972
  %v974 = vpop.f32.mrb[0].mxu0
  %975 = vdwg.mxu0
  %v976 = vadd.f32 %v483, %v973
  %v977 = vmul.f32 %v976, %v510
  %v978 = vtanh.pop %v977
  %v979 = vmul.f32 %v978, 0.5
  %v980 = vadd.f32 %v979, 0.5
  %v981 = vmul.f32 %v980, %v894
  %983 = vrot.lane.b32.xlu0 %v978, 32
  %v984 = vpop.permute.xlu0 %983
  %v986 = vmul.f32 %v980, %v984
  %988 = vrot.lane.b32.xlu0 %v986, 32
  %v989 = vpop.permute.xlu0 %988
  %v991 = vadd.f32 %v981, %v989
  %v992 = vtanh.pop %v991
  %994 = vrot.lane.b32.xlu0 %v992, 32
  %v995 = vpop.permute.xlu0 %994
  %v997 = vmul.f32 %v980, %v995
  %999 = vrot.lane.b32.xlu0 %v997, 64
  %v1000 = vpop.permute.xlu0 %999
  %v1001 = vsel %vm223, %v1000, 0
  %1003 = vmatprep.subr.mxu0 0.0
  %1004 = vmatpush1.msra.mxu0 %v501
  %1005 = vmatprep.subr.mxu0 0.0
  %1006 = vmatpush1.msra.mxu0 %v502
  %1007 = vmatprep.subr.mxu0 0.0
  %1008 = vmatpush1.msra.mxu0 %v503
  %1009 = vmatprep.subr.mxu0 0.0
  %1010 = vmatpush1.msra.mxu0 %v504
  %1011 = vmatprep.subr.mxu0 0.0
  %1012 = vmatpush1.msra.mxu0 0.0
  %1013 = vmatprep.subr.mxu0 0.0
  %1014 = vmatpush1.msra.mxu0 0.0
  %1015 = vmatprep.subr.mxu0 0.0
  %1016 = vmatpush1.msra.mxu0 0.0
  %1017 = vmatprep.subr.mxu0 0.0
  %1018 = vmatpush1.msra.mxu0 0.0
  %1019 = vmatprep.subr.mxu0 0.0
  %1020 = vmatpush1.msra.mxu0 0.0
  %1021 = vmatprep.subr.mxu0 0.0
  %1022 = vmatpush1.msra.mxu0 0.0
  %1023 = vmatprep.subr.mxu0 0.0
  %1024 = vmatpush1.msra.mxu0 0.0
  %1025 = vmatprep.subr.mxu0 0.0
  %1026 = vmatpush1.msra.mxu0 0.0
  %1027 = vmatprep.subr.mxu0 0.0
  %1028 = vmatpush1.msra.mxu0 0.0
  %1029 = vmatprep.subr.mxu0 0.0
  %1030 = vmatpush1.msra.mxu0 0.0
  %1031 = vmatprep.subr.mxu0 0.0
  %1032 = vmatpush1.msra.mxu0 0.0
  %1033 = vmatprep.subr.mxu0 0.0
  %1034 = vmatpush1.msra.mxu0 0.0
  %1035 = vmatprep.subr.mxu0 0.0
  %1036 = vmatpush1.msra.mxu0 0.0
  %1037 = vmatprep.subr.mxu0 0.0
  %1038 = vmatpush1.msra.mxu0 0.0
  %1039 = vmatprep.subr.mxu0 0.0
  %1040 = vmatpush1.msra.mxu0 0.0
  %1041 = vmatprep.subr.mxu0 0.0
  %1042 = vmatpush1.msra.mxu0 0.0
  %1043 = vmatprep.subr.mxu0 0.0
  %1044 = vmatpush1.msra.mxu0 0.0
  %1045 = vmatprep.subr.mxu0 0.0
  %1046 = vmatpush1.msra.mxu0 0.0
  %1047 = vmatprep.subr.mxu0 0.0
  %1048 = vmatpush1.msra.mxu0 0.0
  %1049 = vmatprep.subr.mxu0 0.0
  %1050 = vmatpush1.msra.mxu0 0.0
  %1051 = vmatprep.subr.mxu0 0.0
  %1052 = vmatpush1.msra.mxu0 0.0
  %1053 = vmatprep.subr.mxu0 0.0
  %1054 = vmatpush1.msra.mxu0 0.0
  %1055 = vmatprep.subr.mxu0 0.0
  %1056 = vmatpush1.msra.mxu0 0.0
  %1057 = vmatprep.subr.mxu0 0.0
  %1058 = vmatpush1.msra.mxu0 0.0
  %1059 = vmatprep.subr.mxu0 0.0
  %1060 = vmatpush1.msra.mxu0 0.0
  %1061 = vmatprep.subr.mxu0 0.0
  %1062 = vmatpush1.msra.mxu0 0.0
  %1063 = vmatprep.subr.mxu0 0.0
  %1064 = vmatpush1.msra.mxu0 0.0
  %1065 = vmatprep.subr.mxu0 0.0
  %1066 = vmatpush1.msra.mxu0 0.0
  %1067 = vmatprep.mubr.f32.mxu0 0.0
  %1068 = vmatmul.mubr.f32.gmra.mrb[0].mxu0 %v1001
  %v1069 = vpop.f32.mrb[0].mxu0
  %v1070 = vadd.f32 0.0, %v1069
  %v1071 = vpop.f32.mrb[0].mxu0
  %1072 = vdwg.mxu0
  %v1073 = vadd.f32 %v488, %v1070
  %v1074 = vmul.f32 %v1073, %v510
  %v1075 = vtanh.pop %v1074
  %v1076 = vmul.f32 %v1075, 0.5
  %v1077 = vadd.f32 %v1076, 0.5
  %v1078 = vmul.f32 %v1077, %v991
  %1080 = vrot.lane.b32.xlu0 %v1075, 32
  %v1081 = vpop.permute.xlu0 %1080
  %v1083 = vmul.f32 %v1077, %v1081
  %1085 = vrot.lane.b32.xlu0 %v1083, 32
  %v1086 = vpop.permute.xlu0 %1085
  %v1088 = vadd.f32 %v1078, %v1086
  %v1089 = vtanh.pop %v1088
  %1091 = vrot.lane.b32.xlu0 %v1089, 32
  %v1092 = vpop.permute.xlu0 %1091
  %v1094 = vmul.f32 %v1077, %v1092
  %1096 = vrot.lane.b32.xlu0 %v1094, 64
  %v1097 = vpop.permute.xlu0 %1096
  %v1098 = vsel %vm223, %v1097, 0
  %1100 = vmatprep.subr.mxu0 0.0
  %1101 = vmatpush1.msra.mxu0 %v501
  %1102 = vmatprep.subr.mxu0 0.0
  %1103 = vmatpush1.msra.mxu0 %v502
  %1104 = vmatprep.subr.mxu0 0.0
  %1105 = vmatpush1.msra.mxu0 %v503
  %1106 = vmatprep.subr.mxu0 0.0
  %1107 = vmatpush1.msra.mxu0 %v504
  %1108 = vmatprep.subr.mxu0 0.0
  %1109 = vmatpush1.msra.mxu0 0.0
  %1110 = vmatprep.subr.mxu0 0.0
  %1111 = vmatpush1.msra.mxu0 0.0
  %1112 = vmatprep.subr.mxu0 0.0
  %1113 = vmatpush1.msra.mxu0 0.0
  %1114 = vmatprep.subr.mxu0 0.0
  %1115 = vmatpush1.msra.mxu0 0.0
  %1116 = vmatprep.subr.mxu0 0.0
  %1117 = vmatpush1.msra.mxu0 0.0
  %1118 = vmatprep.subr.mxu0 0.0
  %1119 = vmatpush1.msra.mxu0 0.0
  %1120 = vmatprep.subr.mxu0 0.0
  %1121 = vmatpush1.msra.mxu0 0.0
  %1122 = vmatprep.subr.mxu0 0.0
  %1123 = vmatpush1.msra.mxu0 0.0
  %1124 = vmatprep.subr.mxu0 0.0
  %1125 = vmatpush1.msra.mxu0 0.0
  %1126 = vmatprep.subr.mxu0 0.0
  %1127 = vmatpush1.msra.mxu0 0.0
  %1128 = vmatprep.subr.mxu0 0.0
  %1129 = vmatpush1.msra.mxu0 0.0
  %1130 = vmatprep.subr.mxu0 0.0
  %1131 = vmatpush1.msra.mxu0 0.0
  %1132 = vmatprep.subr.mxu0 0.0
  %1133 = vmatpush1.msra.mxu0 0.0
  %1134 = vmatprep.subr.mxu0 0.0
  %1135 = vmatpush1.msra.mxu0 0.0
  %1136 = vmatprep.subr.mxu0 0.0
  %1137 = vmatpush1.msra.mxu0 0.0
  %1138 = vmatprep.subr.mxu0 0.0
  %1139 = vmatpush1.msra.mxu0 0.0
  %1140 = vmatprep.subr.mxu0 0.0
  %1141 = vmatpush1.msra.mxu0 0.0
  %1142 = vmatprep.subr.mxu0 0.0
  %1143 = vmatpush1.msra.mxu0 0.0
  %1144 = vmatprep.subr.mxu0 0.0
  %1145 = vmatpush1.msra.mxu0 0.0
  %1146 = vmatprep.subr.mxu0 0.0
  %1147 = vmatpush1.msra.mxu0 0.0
  %1148 = vmatprep.subr.mxu0 0.0
  %1149 = vmatpush1.msra.mxu0 0.0
  %1150 = vmatprep.subr.mxu0 0.0
  %1151 = vmatpush1.msra.mxu0 0.0
  %1152 = vmatprep.subr.mxu0 0.0
  %1153 = vmatpush1.msra.mxu0 0.0
  %1154 = vmatprep.subr.mxu0 0.0
  %1155 = vmatpush1.msra.mxu0 0.0
  %1156 = vmatprep.subr.mxu0 0.0
  %1157 = vmatpush1.msra.mxu0 0.0
  %1158 = vmatprep.subr.mxu0 0.0
  %1159 = vmatpush1.msra.mxu0 0.0
  %1160 = vmatprep.subr.mxu0 0.0
  %1161 = vmatpush1.msra.mxu0 0.0
  %1162 = vmatprep.subr.mxu0 0.0
  %1163 = vmatpush1.msra.mxu0 0.0
  %1164 = vmatprep.mubr.f32.mxu0 0.0
  %1165 = vmatmul.mubr.f32.gmra.mrb[0].mxu0 %v1098
  %v1166 = vpop.f32.mrb[0].mxu0
  %v1167 = vadd.f32 0.0, %v1166
  %v1168 = vpop.f32.mrb[0].mxu0
  %1169 = vdwg.mxu0
  %v1170 = vadd.f32 %v493, %v1167
  %v1171 = vmul.f32 %v1170, %v510
  %v1172 = vtanh.pop %v1171
  %v1173 = vmul.f32 %v1172, 0.5
  %v1174 = vadd.f32 %v1173, 0.5
  %v1175 = vmul.f32 %v1174, %v1088
  %1177 = vrot.lane.b32.xlu0 %v1172, 32
  %v1178 = vpop.permute.xlu0 %1177
  %v1180 = vmul.f32 %v1174, %v1178
  %1182 = vrot.lane.b32.xlu0 %v1180, 32
  %v1183 = vpop.permute.xlu0 %1182
  %v1185 = vadd.f32 %v1175, %v1183
  %v1186 = vtanh.pop %v1185
  %1188 = vrot.lane.b32.xlu0 %v1186, 32
  %v1189 = vpop.permute.xlu0 %1188
  %v1191 = vmul.f32 %v1174, %v1189
  %1193 = vrot.lane.b32.xlu0 %v1191, 64
  %v1194 = vpop.permute.xlu0 %1193
  %v1195 = vsel %vm223, %v1194, 0
  %1197 = vmatprep.subr.mxu0 0.0
  %1198 = vmatpush1.msra.mxu0 %v501
  %1199 = vmatprep.subr.mxu0 0.0
  %1200 = vmatpush1.msra.mxu0 %v502
  %1201 = vmatprep.subr.mxu0 0.0
  %1202 = vmatpush1.msra.mxu0 %v503
  %1203 = vmatprep.subr.mxu0 0.0
  %1204 = vmatpush1.msra.mxu0 %v504
  %1205 = vmatprep.subr.mxu0 0.0
  %1206 = vmatpush1.msra.mxu0 0.0
  %1207 = vmatprep.subr.mxu0 0.0
  %1208 = vmatpush1.msra.mxu0 0.0
  %1209 = vmatprep.subr.mxu0 0.0
  %1210 = vmatpush1.msra.mxu0 0.0
  %1211 = vmatprep.subr.mxu0 0.0
  %1212 = vmatpush1.msra.mxu0 0.0
  %1213 = vmatprep.subr.mxu0 0.0
  %1214 = vmatpush1.msra.mxu0 0.0
  %1215 = vmatprep.subr.mxu0 0.0
  %1216 = vmatpush1.msra.mxu0 0.0
  %1217 = vmatprep.subr.mxu0 0.0
  %1218 = vmatpush1.msra.mxu0 0.0
  %1219 = vmatprep.subr.mxu0 0.0
  %1220 = vmatpush1.msra.mxu0 0.0
  %1221 = vmatprep.subr.mxu0 0.0
  %1222 = vmatpush1.msra.mxu0 0.0
  %1223 = vmatprep.subr.mxu0 0.0
  %1224 = vmatpush1.msra.mxu0 0.0
  %1225 = vmatprep.subr.mxu0 0.0
  %1226 = vmatpush1.msra.mxu0 0.0
  %1227 = vmatprep.subr.mxu0 0.0
  %1228 = vmatpush1.msra.mxu0 0.0
  %1229 = vmatprep.subr.mxu0 0.0
  %1230 = vmatpush1.msra.mxu0 0.0
  %1231 = vmatprep.subr.mxu0 0.0
  %1232 = vmatpush1.msra.mxu0 0.0
  %1233 = vmatprep.subr.mxu0 0.0
  %1234 = vmatpush1.msra.mxu0 0.0
  %1235 = vmatprep.subr.mxu0 0.0
  %1236 = vmatpush1.msra.mxu0 0.0
  %1237 = vmatprep.subr.mxu0 0.0
  %1238 = vmatpush1.msra.mxu0 0.0
  %1239 = vmatprep.subr.mxu0 0.0
  %1240 = vmatpush1.msra.mxu0 0.0
  %1241 = vmatprep.subr.mxu0 0.0
  %1242 = vmatpush1.msra.mxu0 0.0
  %1243 = vmatprep.subr.mxu0 0.0
  %1244 = vmatpush1.msra.mxu0 0.0
  %1245 = vmatprep.subr.mxu0 0.0
  %1246 = vmatpush1.msra.mxu0 0.0
  %1247 = vmatprep.subr.mxu0 0.0
  %1248 = vmatpush1.msra.mxu0 0.0
  %1249 = vmatprep.subr.mxu0 0.0
  %1250 = vmatpush1.msra.mxu0 0.0
  %1251 = vmatprep.subr.mxu0 0.0
  %1252 = vmatpush1.msra.mxu0 0.0
  %1253 = vmatprep.subr.mxu0 0.0
  %1254 = vmatpush1.msra.mxu0 0.0
  %1255 = vmatprep.subr.mxu0 0.0
  %1256 = vmatpush1.msra.mxu0 0.0
  %1257 = vmatprep.subr.mxu0 0.0
  %1258 = vmatpush1.msra.mxu0 0.0
  %1259 = vmatprep.subr.mxu0 0.0
  %1260 = vmatpush1.msra.mxu0 0.0
  %1261 = vmatprep.mubr.f32.mxu0 0.0
  %1262 = vmatmul.mubr.f32.gmra.mrb[0].mxu0 %v1195
  %v1263 = vpop.f32.mrb[0].mxu0
  %v1264 = vadd.f32 0.0, %v1263
  %v1265 = vpop.f32.mrb[0].mxu0
  %1266 = vdwg.mxu0
  %v1267 = vadd.f32 %v498, %v1264
  %v1268 = vmul.f32 %v1267, %v510
  %v1269 = vtanh.pop %v1268
  %v1270 = vmul.f32 %v1269, 0.5
  %v1271 = vadd.f32 %v1270, 0.5
  %v1272 = vmul.f32 %v1271, %v1185
  %1274 = vrot.lane.b32.xlu0 %v1269, 32
  %v1275 = vpop.permute.xlu0 %1274
  %v1277 = vmul.f32 %v1271, %v1275
  %1279 = vrot.lane.b32.xlu0 %v1277, 32
  %v1280 = vpop.permute.xlu0 %1279
  %v1282 = vadd.f32 %v1272, %v1280
  %v1283 = vtanh.pop %v1282
  %1285 = vrot.lane.b32.xlu0 %v1283, 32
  %v1286 = vpop.permute.xlu0 %1285
  %v1288 = vmul.f32 %v1271, %v1286
  %1290 = vrot.lane.b32.xlu0 %v1288, 64
  %v1291 = vpop.permute.xlu0 %1290
  %1293 = vst.msk [vmem:[%s15] sm:$0xff] %vm223, %v1291
  %1295 = vrot.lane.b32.xlu0 %v1282, 96
  %v1296 = vpop.permute.xlu0 %1295
  %1298 = vst.msk [vmem:[%s16] sm:$0xff] %vm223, %v1296
  %1299 = vrot.lane.b32.xlu0 %v353, 64
  %v1300 = vpop.permute.xlu0 %1299
  %1301 = vrot.lane.b32.xlu0 %v354, 64
  %v1302 = vpop.permute.xlu0 %1301
  %1303 = vrot.lane.b32.xlu0 %v355, 64
  %v1304 = vpop.permute.xlu0 %1303
  %1305 = vrot.lane.b32.xlu0 %v356, 64
  %v1306 = vpop.permute.xlu0 %1305
  %1307 = vrot.lane.b32.xlu0 %v357, 64
  %v1308 = vpop.permute.xlu0 %1307
  %1309 = vrot.lane.b32.xlu0 %v358, 64
  %v1310 = vpop.permute.xlu0 %1309
  %1311 = vrot.lane.b32.xlu0 %v359, 64
  %v1312 = vpop.permute.xlu0 %1311
  %1313 = vrot.lane.b32.xlu0 %v360, 64
  %v1314 = vpop.permute.xlu0 %1313
  %v1323 = vadd.f32 %v609, %v1300
  %v1324 = vadd.f32 %v706, %v1302
  %v1325 = vadd.f32 %v803, %v1304
  %v1326 = vadd.f32 %v900, %v1306
  %v1327 = vadd.f32 %v997, %v1308
  %v1328 = vadd.f32 %v1094, %v1310
  %v1329 = vadd.f32 %v1191, %v1312
  %v1330 = vadd.f32 %v1288, %v1314
  %v1331 = vld [vmem:[%s8] sm:$0xff]
  %v1332 = vld [vmem:[%s8 + $0x8] sm:$0xff]
  %v1333 = vld [vmem:[%s8 + $0x10] sm:$0xff]
  %v1334 = vld [vmem:[%s8 + $0x18] sm:$0xff]
  %v1335 = vld [vmem:[%s9] sm:$0x1]
  %v1337 = vlaneseq
  %v1338 = vshrl.u32 %v1337, 7
  %v1339 = vsub.s32 0, %v1338
  %v1340 = vrot.slane %v1335, %v1339
  %1350 = vrot.lane.b32.xlu0 %v1323, 64
  %v1351 = vpop.permute.xlu0 %1350
  %1352 = vrot.lane.b32.xlu0 %v1324, 64
  %v1353 = vpop.permute.xlu0 %1352
  %1354 = vrot.lane.b32.xlu0 %v1325, 64
  %v1355 = vpop.permute.xlu0 %1354
  %1356 = vrot.lane.b32.xlu0 %v1326, 64
  %v1357 = vpop.permute.xlu0 %1356
  %1358 = vrot.lane.b32.xlu0 %v1327, 64
  %v1359 = vpop.permute.xlu0 %1358
  %1360 = vrot.lane.b32.xlu0 %v1328, 64
  %v1361 = vpop.permute.xlu0 %1360
  %1362 = vrot.lane.b32.xlu0 %v1329, 64
  %v1363 = vpop.permute.xlu0 %1362
  %1364 = vrot.lane.b32.xlu0 %v1330, 64
  %v1365 = vpop.permute.xlu0 %1364
  %v1366 = vsel %vm223, %v1351, 0
  %v1368 = vsel %vm223, %v1353, 0
  %v1370 = vsel %vm223, %v1355, 0
  %v1372 = vsel %vm223, %v1357, 0
  %v1374 = vsel %vm223, %v1359, 0
  %v1376 = vsel %vm223, %v1361, 0
  %v1378 = vsel %vm223, %v1363, 0
  %v1380 = vsel %vm223, %v1365, 0
  %1382 = vmatprep.subr.mxu0 0.0
  %1383 = vmatpush1.msra.mxu0 %v1331
  %1384 = vmatprep.subr.mxu0 0.0
  %1385 = vmatpush1.msra.mxu0 %v1332
  %1386 = vmatprep.subr.mxu0 0.0
  %1387 = vmatpush1.msra.mxu0 %v1333
  %1388 = vmatprep.subr.mxu0 0.0
  %1389 = vmatpush1.msra.mxu0 %v1334
  %1390 = vmatprep.subr.mxu0 0.0
  %1391 = vmatpush1.msra.mxu0 0.0
  %1392 = vmatprep.subr.mxu0 0.0
  %1393 = vmatpush1.msra.mxu0 0.0
  %1394 = vmatprep.subr.mxu0 0.0
  %1395 = vmatpush1.msra.mxu0 0.0
  %1396 = vmatprep.subr.mxu0 0.0
  %1397 = vmatpush1.msra.mxu0 0.0
  %1398 = vmatprep.subr.mxu0 0.0
  %1399 = vmatpush1.msra.mxu0 0.0
  %1400 = vmatprep.subr.mxu0 0.0
  %1401 = vmatpush1.msra.mxu0 0.0
  %1402 = vmatprep.subr.mxu0 0.0
  %1403 = vmatpush1.msra.mxu0 0.0
  %1404 = vmatprep.subr.mxu0 0.0
  %1405 = vmatpush1.msra.mxu0 0.0
  %1406 = vmatprep.subr.mxu0 0.0
  %1407 = vmatpush1.msra.mxu0 0.0
  %1408 = vmatprep.subr.mxu0 0.0
  %1409 = vmatpush1.msra.mxu0 0.0
  %1410 = vmatprep.subr.mxu0 0.0
  %1411 = vmatpush1.msra.mxu0 0.0
  %1412 = vmatprep.subr.mxu0 0.0
  %1413 = vmatpush1.msra.mxu0 0.0
  %1414 = vmatprep.subr.mxu0 0.0
  %1415 = vmatpush1.msra.mxu0 0.0
  %1416 = vmatprep.subr.mxu0 0.0
  %1417 = vmatpush1.msra.mxu0 0.0
  %1418 = vmatprep.subr.mxu0 0.0
  %1419 = vmatpush1.msra.mxu0 0.0
  %1420 = vmatprep.subr.mxu0 0.0
  %1421 = vmatpush1.msra.mxu0 0.0
  %1422 = vmatprep.subr.mxu0 0.0
  %1423 = vmatpush1.msra.mxu0 0.0
  %1424 = vmatprep.subr.mxu0 0.0
  %1425 = vmatpush1.msra.mxu0 0.0
  %1426 = vmatprep.subr.mxu0 0.0
  %1427 = vmatpush1.msra.mxu0 0.0
  %1428 = vmatprep.subr.mxu0 0.0
  %1429 = vmatpush1.msra.mxu0 0.0
  %1430 = vmatprep.subr.mxu0 0.0
  %1431 = vmatpush1.msra.mxu0 0.0
  %1432 = vmatprep.subr.mxu0 0.0
  %1433 = vmatpush1.msra.mxu0 0.0
  %1434 = vmatprep.subr.mxu0 0.0
  %1435 = vmatpush1.msra.mxu0 0.0
  %1436 = vmatprep.subr.mxu0 0.0
  %1437 = vmatpush1.msra.mxu0 0.0
  %1438 = vmatprep.subr.mxu0 0.0
  %1439 = vmatpush1.msra.mxu0 0.0
  %1440 = vmatprep.subr.mxu0 0.0
  %1441 = vmatpush1.msra.mxu0 0.0
  %1442 = vmatprep.subr.mxu0 0.0
  %1443 = vmatpush1.msra.mxu0 0.0
  %1444 = vmatprep.subr.mxu0 0.0
  %1445 = vmatpush1.msra.mxu0 0.0
  %1446 = vmatprep.mubr.f32.mxu0 0.0
  %1447 = vmatmul.mubr.f32.gmra.mrb[0].mxu0 %v1366
  %v1448 = vpop.f32.mrb[0].mxu0
  %v1449 = vadd.f32 %v1340, %v1448
  %v1450 = vpop.f32.mrb[0].mxu0
  %1451 = vmatprep.mubr.f32.mxu0 0.0
  %1452 = vmatmul.mubr.f32.gmra.mrb[0].mxu0 %v1368
  %v1453 = vpop.f32.mrb[0].mxu0
  %v1454 = vadd.f32 %v1340, %v1453
  %v1455 = vpop.f32.mrb[0].mxu0
  %1456 = vmatprep.mubr.f32.mxu0 0.0
  %1457 = vmatmul.mubr.f32.gmra.mrb[0].mxu0 %v1370
  %v1458 = vpop.f32.mrb[0].mxu0
  %v1459 = vadd.f32 %v1340, %v1458
  %v1460 = vpop.f32.mrb[0].mxu0
  %1461 = vmatprep.mubr.f32.mxu0 0.0
  %1462 = vmatmul.mubr.f32.gmra.mrb[0].mxu0 %v1372
  %v1463 = vpop.f32.mrb[0].mxu0
  %v1464 = vadd.f32 %v1340, %v1463
  %v1465 = vpop.f32.mrb[0].mxu0
  %1466 = vmatprep.mubr.f32.mxu0 0.0
  %1467 = vmatmul.mubr.f32.gmra.mrb[0].mxu0 %v1374
  %v1468 = vpop.f32.mrb[0].mxu0
  %v1469 = vadd.f32 %v1340, %v1468
  %v1470 = vpop.f32.mrb[0].mxu0
  %1471 = vmatprep.mubr.f32.mxu0 0.0
  %1472 = vmatmul.mubr.f32.gmra.mrb[0].mxu0 %v1376
  %v1473 = vpop.f32.mrb[0].mxu0
  %v1474 = vadd.f32 %v1340, %v1473
  %v1475 = vpop.f32.mrb[0].mxu0
  %1476 = vmatprep.mubr.f32.mxu0 0.0
  %1477 = vmatmul.mubr.f32.gmra.mrb[0].mxu0 %v1378
  %v1478 = vpop.f32.mrb[0].mxu0
  %v1479 = vadd.f32 %v1340, %v1478
  %v1480 = vpop.f32.mrb[0].mxu0
  %1481 = vmatprep.mubr.f32.mxu0 0.0
  %1482 = vmatmul.mubr.f32.gmra.mrb[0].mxu0 %v1380
  %v1483 = vpop.f32.mrb[0].mxu0
  %v1484 = vadd.f32 %v1340, %v1483
  %v1485 = vpop.f32.mrb[0].mxu0
  %1486 = vdwg.mxu0
  %v1487 = vtanh.pop %v1449
  %v1488 = vtanh.pop %v1454
  %v1489 = vtanh.pop %v1459
  %v1490 = vtanh.pop %v1464
  %v1491 = vtanh.pop %v1469
  %v1492 = vtanh.pop %v1474
  %v1493 = vtanh.pop %v1479
  %v1494 = vtanh.pop %v1484
  %v1495 = vld [vmem:[%s10] sm:$0xff]
  %v1496 = vld [vmem:[%s10 + $0x8] sm:$0xff]
  %v1497 = vld [vmem:[%s10 + $0x10] sm:$0xff]
  %v1498 = vld [vmem:[%s10 + $0x18] sm:$0xff]
  %v1499 = vld [vmem:[%s11] sm:$0x1]
  %v1501 = vlaneseq
  %v1502 = vshrl.u32 %v1501, 7
  %v1503 = vsub.s32 0, %v1502
  %v1504 = vrot.slane %v1499, %v1503
  %v1507 = vsel %vm223, %v1487, 0
  %v1510 = vsel %vm223, %v1488, 0
  %v1513 = vsel %vm223, %v1489, 0
  %v1516 = vsel %vm223, %v1490, 0
  %v1519 = vsel %vm223, %v1491, 0
  %v1522 = vsel %vm223, %v1492, 0
  %v1525 = vsel %vm223, %v1493, 0
  %v1528 = vsel %vm223, %v1494, 0
  %1530 = vmatprep.subr.mxu0 0.0
  %1531 = vmatpush1.msra.mxu0 %v1495
  %1532 = vmatprep.subr.mxu0 0.0
  %1533 = vmatpush1.msra.mxu0 %v1496
  %1534 = vmatprep.subr.mxu0 0.0
  %1535 = vmatpush1.msra.mxu0 %v1497
  %1536 = vmatprep.subr.mxu0 0.0
  %1537 = vmatpush1.msra.mxu0 %v1498
  %1538 = vmatprep.subr.mxu0 0.0
  %1539 = vmatpush1.msra.mxu0 0.0
  %1540 = vmatprep.subr.mxu0 0.0
  %1541 = vmatpush1.msra.mxu0 0.0
  %1542 = vmatprep.subr.mxu0 0.0
  %1543 = vmatpush1.msra.mxu0 0.0
  %1544 = vmatprep.subr.mxu0 0.0
  %1545 = vmatpush1.msra.mxu0 0.0
  %1546 = vmatprep.subr.mxu0 0.0
  %1547 = vmatpush1.msra.mxu0 0.0
  %1548 = vmatprep.subr.mxu0 0.0
  %1549 = vmatpush1.msra.mxu0 0.0
  %1550 = vmatprep.subr.mxu0 0.0
  %1551 = vmatpush1.msra.mxu0 0.0
  %1552 = vmatprep.subr.mxu0 0.0
  %1553 = vmatpush1.msra.mxu0 0.0
  %1554 = vmatprep.subr.mxu0 0.0
  %1555 = vmatpush1.msra.mxu0 0.0
  %1556 = vmatprep.subr.mxu0 0.0
  %1557 = vmatpush1.msra.mxu0 0.0
  %1558 = vmatprep.subr.mxu0 0.0
  %1559 = vmatpush1.msra.mxu0 0.0
  %1560 = vmatprep.subr.mxu0 0.0
  %1561 = vmatpush1.msra.mxu0 0.0
  %1562 = vmatprep.subr.mxu0 0.0
  %1563 = vmatpush1.msra.mxu0 0.0
  %1564 = vmatprep.subr.mxu0 0.0
  %1565 = vmatpush1.msra.mxu0 0.0
  %1566 = vmatprep.subr.mxu0 0.0
  %1567 = vmatpush1.msra.mxu0 0.0
  %1568 = vmatprep.subr.mxu0 0.0
  %1569 = vmatpush1.msra.mxu0 0.0
  %1570 = vmatprep.subr.mxu0 0.0
  %1571 = vmatpush1.msra.mxu0 0.0
  %1572 = vmatprep.subr.mxu0 0.0
  %1573 = vmatpush1.msra.mxu0 0.0
  %1574 = vmatprep.subr.mxu0 0.0
  %1575 = vmatpush1.msra.mxu0 0.0
  %1576 = vmatprep.subr.mxu0 0.0
  %1577 = vmatpush1.msra.mxu0 0.0
  %1578 = vmatprep.subr.mxu0 0.0
  %1579 = vmatpush1.msra.mxu0 0.0
  %1580 = vmatprep.subr.mxu0 0.0
  %1581 = vmatpush1.msra.mxu0 0.0
  %1582 = vmatprep.subr.mxu0 0.0
  %1583 = vmatpush1.msra.mxu0 0.0
  %1584 = vmatprep.subr.mxu0 0.0
  %1585 = vmatpush1.msra.mxu0 0.0
  %1586 = vmatprep.subr.mxu0 0.0
  %1587 = vmatpush1.msra.mxu0 0.0
  %1588 = vmatprep.subr.mxu0 0.0
  %1589 = vmatpush1.msra.mxu0 0.0
  %1590 = vmatprep.subr.mxu0 0.0
  %1591 = vmatpush1.msra.mxu0 0.0
  %1592 = vmatprep.subr.mxu0 0.0
  %1593 = vmatpush1.msra.mxu0 0.0
  %1594 = vmatprep.mubr.f32.mxu0 0.0
  %1595 = vmatmul.mubr.f32.gmra.mrb[0].mxu0 %v1507
  %v1596 = vpop.f32.mrb[0].mxu0
  %v1597 = vadd.f32 %v1504, %v1596
  %v1598 = vpop.f32.mrb[0].mxu0
  %1599 = vmatprep.mubr.f32.mxu0 0.0
  %1600 = vmatmul.mubr.f32.gmra.mrb[0].mxu0 %v1510
  %v1601 = vpop.f32.mrb[0].mxu0
  %v1602 = vadd.f32 %v1504, %v1601
  %v1603 = vpop.f32.mrb[0].mxu0
  %1604 = vmatprep.mubr.f32.mxu0 0.0
  %1605 = vmatmul.mubr.f32.gmra.mrb[0].mxu0 %v1513
  %v1606 = vpop.f32.mrb[0].mxu0
  %v1607 = vadd.f32 %v1504, %v1606
  %v1608 = vpop.f32.mrb[0].mxu0
  %1609 = vmatprep.mubr.f32.mxu0 0.0
  %1610 = vmatmul.mubr.f32.gmra.mrb[0].mxu0 %v1516
  %v1611 = vpop.f32.mrb[0].mxu0
  %v1612 = vadd.f32 %v1504, %v1611
  %v1613 = vpop.f32.mrb[0].mxu0
  %1614 = vmatprep.mubr.f32.mxu0 0.0
  %1615 = vmatmul.mubr.f32.gmra.mrb[0].mxu0 %v1519
  %v1616 = vpop.f32.mrb[0].mxu0
  %v1617 = vadd.f32 %v1504, %v1616
  %v1618 = vpop.f32.mrb[0].mxu0
  %1619 = vmatprep.mubr.f32.mxu0 0.0
  %1620 = vmatmul.mubr.f32.gmra.mrb[0].mxu0 %v1522
  %v1621 = vpop.f32.mrb[0].mxu0
  %v1622 = vadd.f32 %v1504, %v1621
  %v1623 = vpop.f32.mrb[0].mxu0
  %1624 = vmatprep.mubr.f32.mxu0 0.0
  %1625 = vmatmul.mubr.f32.gmra.mrb[0].mxu0 %v1525
  %v1626 = vpop.f32.mrb[0].mxu0
  %v1627 = vadd.f32 %v1504, %v1626
  %v1628 = vpop.f32.mrb[0].mxu0
  %1629 = vmatprep.mubr.f32.mxu0 0.0
  %1630 = vmatmul.mubr.f32.gmra.mrb[0].mxu0 %v1528
  %v1631 = vpop.f32.mrb[0].mxu0
  %v1632 = vadd.f32 %v1504, %v1631
  %v1633 = vpop.f32.mrb[0].mxu0
  %1634 = vdwg.mxu0
  %vm1635 = vcmask 31744
  %1636 = vst.msk [vmem:[%s14] sm:$0xff] %vm1635, %v1597
  %1637 = vst.msk [vmem:[%s14 + $0x8] sm:$0xff] %vm1635, %v1602
  %1638 = vst.msk [vmem:[%s14 + $0x10] sm:$0xff] %vm1635, %v1607
  %1639 = vst.msk [vmem:[%s14 + $0x18] sm:$0xff] %vm1635, %v1612
  %1640 = vst.msk [vmem:[%s14 + $0x20] sm:$0xff] %vm1635, %v1617
  %1641 = vst.msk [vmem:[%s14 + $0x28] sm:$0xff] %vm1635, %v1622
  %1642 = vst.msk [vmem:[%s14 + $0x30] sm:$0xff] %vm1635, %v1627
  %1643 = vst.msk [vmem:[%s14 + $0x38] sm:$0xff] %vm1635, %v1632
  // Predicated region
  $region58: #{lstm_estimator_forward.1} parent=0 // pred_check
    _
  $region59: #{lstm_estimator_forward.1} parent=0 // pred_check_branch
    %1645 = sbr.rel (0) target = $region61
  $region60: #{lstm_estimator_forward.1} parent=0 // pred_region
    _
  $region61: #{lstm_estimator_forward.1} parent=0 // pred_fallthru
    _
  // Predicated region
  $region62: #{lstm_estimator_forward.1} parent=0 // pred_check
    _
  $region63: #{lstm_estimator_forward.1} parent=0 // pred_check_branch
    %1647 = sbr.rel (0) target = $region65
  $region64: #{lstm_estimator_forward.1} parent=0 // pred_region
    _
  $region65: #{lstm_estimator_forward.1} parent=0 // pred_fallthru
    _
  // Predicated region
  $region66: #{lstm_estimator_forward.1} parent=0 // pred_check
    _
  $region67: #{lstm_estimator_forward.1} parent=0 // pred_check_branch
    %1649 = sbr.rel (0) target = $region69
  $region68: #{lstm_estimator_forward.1} parent=0 // pred_region
    _
  $region69: #{lstm_estimator_forward.1} parent=0 // pred_fallthru
    _
  // Predicated region
  $region70: #{lstm_estimator_forward.1} parent=0 // pred_check
    _
  $region71: #{lstm_estimator_forward.1} parent=0 // pred_check_branch
    %1651 = sbr.rel (0) target = $region73
  $region72: #{lstm_estimator_forward.1} parent=0 // pred_region
    _
  $region73: #{lstm_estimator_forward.1} parent=0 // pred_fallthru
    _
  // Predicated region
  $region74: #{lstm_estimator_forward.1} parent=0 // pred_check
    _
  $region75: #{lstm_estimator_forward.1} parent=0 // pred_check_branch
    %1653 = sbr.rel (0) target = $region77
  $region76: #{lstm_estimator_forward.1} parent=0 // pred_region
    _
  $region77: #{lstm_estimator_forward.1} parent=0 // pred_fallthru
    _
  // Predicated region
  $region78: #{lstm_estimator_forward.1} parent=0 // pred_check
    _
  $region79: #{lstm_estimator_forward.1} parent=0 // pred_check_branch
    %1655 = sbr.rel (0) target = $region81
  $region80: #{lstm_estimator_forward.1} parent=0 // pred_region
    _
  $region81: #{lstm_estimator_forward.1} parent=0 // pred_fallthru
    _

</llo_original>
